<compile_context>
chip_gen: v7x
topology: tpu7x:2x2x1
jax: 0.10.0
libtpu: 0.0.40
codegen_flags: <defaults>
</compile_context>

<pallas_src>
import functools

import jax
import jax.numpy as jnp
from jax.experimental import pallas as pl
from jax.experimental.pallas import tpu as pltpu

LANE = 128
_MIB = 1 << 20


def _round_up(x, m):
    return ((x + m - 1) // m) * m


def _vmem_limit_bytes():
    """Generation-aware VMEM cap: ~3/4 of physical (96 MiB v5e/v6e, 48 MiB v7x)."""
    try:
        info = pltpu.get_tpu_info()
        cap = getattr(info, "vmem_capacity_bytes", None)
        if cap is None:
            return 48 * _MIB
        return int(min(100 * _MIB, (cap * 3) // 4))
    except Exception:  # pragma: no cover - conservative fallback, safe everywhere
        return 48 * _MIB


# ---------------------------------------------------------------------------
# Fused single-call kernel (A resident in VMEM; one HBM pass over A).
# ---------------------------------------------------------------------------
def gcn_fused_kernel(a_ref, x_ref, w1_ref, b1_ref, w2_ref, b2_ref, w3_ref, b3_ref,
                     out_ref, *, num_classes):
    a = a_ref[...]

    # Layer 1: transform (X @ W1) then aggregate (A @ P1) -- f32 accumulation.
    p = jnp.dot(x_ref[...], w1_ref[...], preferred_element_type=jnp.float32)
    h = jnp.dot(a, p.astype(jnp.bfloat16), preferred_element_type=jnp.float32)
    h = jnp.maximum(h + b1_ref[...], 0.0).astype(jnp.bfloat16)

    # Layer 2.
    p = jnp.dot(h, w2_ref[...], preferred_element_type=jnp.float32)
    h = jnp.dot(a, p.astype(jnp.bfloat16), preferred_element_type=jnp.float32)
    h = jnp.maximum(h + b2_ref[...], 0.0).astype(jnp.bfloat16)

    # Layer 3 + masked log_softmax over the first num_classes lanes.
    p = jnp.dot(h, w3_ref[...], preferred_element_type=jnp.float32)
    h = jnp.dot(a, p.astype(jnp.bfloat16), preferred_element_type=jnp.float32)
    h = h + b3_ref[...]

    lane = jax.lax.broadcasted_iota(jnp.int32, h.shape, 1)
    valid = lane < num_classes
    h_m = jnp.where(valid, h, jnp.float32(-1e30))
    m = jnp.max(h_m, axis=1, keepdims=True)
    s = h_m - m
    lse = jnp.log(jnp.sum(jnp.exp(s), axis=1, keepdims=True))
    # Padding lanes are written as 0.0 (never -1e30-lse garbage).
    out_ref[...] = jnp.where(valid, s - lse, 0.0)


# ---------------------------------------------------------------------------
# Row-tiled kernels (large-N path: A streamed, intermediates resident).
# ---------------------------------------------------------------------------
def transform_kernel(x_ref, w_ref, out_ref):
    """P_tile = X_tile @ W  (feature transform before aggregation)."""
    out_ref[...] = jnp.dot(
        x_ref[...], w_ref[...], preferred_element_type=jnp.float32
    ).astype(out_ref.dtype)


def agg_transform_kernel(a_ref, p_ref, b_ref, wn_ref, out_ref):
    """OUT_tile = relu(A_tile @ P_full + b) @ W_next."""
    h = jnp.dot(a_ref[...], p_ref[...], preferred_element_type=jnp.float32)
    h = jnp.maximum(h + b_ref[...], 0.0)
    out_ref[...] = jnp.dot(
        h.astype(wn_ref.dtype), wn_ref[...], preferred_element_type=jnp.float32
    ).astype(out_ref.dtype)


def agg_logsoftmax_kernel(a_ref, p_ref, b_ref, out_ref, *, num_classes):
    """OUT_tile = log_softmax(A_tile @ P_full + b) over the first num_classes lanes."""
    h = jnp.dot(a_ref[...], p_ref[...], preferred_element_type=jnp.float32)
    h = h + b_ref[...]
    lane = jax.lax.broadcasted_iota(jnp.int32, h.shape, 1)
    valid = lane < num_classes
    h_m = jnp.where(valid, h, jnp.float32(-1e30))
    m = jnp.max(h_m, axis=1, keepdims=True)
    s = h_m - m
    lse = jnp.log(jnp.sum(jnp.exp(s), axis=1, keepdims=True))
    out_ref[...] = jnp.where(valid, s - lse, 0.0)


# ---------------------------------------------------------------------------
# One-time preparation (graph-build time): pad + cast A, X, weights ONCE.
# ---------------------------------------------------------------------------
def prepare_gcn(a_hat, x, params, num_classes, *, row_tile=256, force_tiled=False):
    (w1, b1), (w2, b2), (w3, b3) = params
    n, f_in = x.shape
    hidden = w1.shape[1]

    row_tile = _round_up(max(row_tile, LANE), LANE)
    f_pad = _round_up(f_in, LANE)
    h_pad = _round_up(hidden, LANE)
    c_pad = _round_up(num_classes, LANE)
    vmem_limit = _vmem_limit_bytes()

    # Decide fused vs tiled from a resident-bytes estimate (single-buffered).
    n_est = _round_up(n, LANE)
    resident = (
        2 * n_est * n_est                       # A (bf16)
        + 2 * n_est * f_pad                     # X (bf16)
        + 2 * (f_pad * h_pad + h_pad * h_pad + h_pad * c_pad)   # weights
        + 4 * n_est * c_pad                     # output (f32)
        + 4 * 4 * n_est * max(h_pad, c_pad)     # f32 intermediates
    )
    fused = (not force_tiled) and resident <= (vmem_limit * 3) // 4

    if fused:
        n_pad = _round_up(n, LANE)
    else:
        n_pad = _round_up(n, row_tile)
        n_tiles = n_pad // row_tile
        # Keep the 'parallel' row axis balanced across v7x's 2 TensorCores.
        if 1 < n_tiles < 8 and n_tiles % 2 == 1:
            n_pad += row_tile

    def pad2(arr, rows, cols, dtype):
        return jnp.pad(
            arr, ((0, rows - arr.shape[0]), (0, cols - arr.shape[1]))
        ).astype(dtype)

    return dict(
        a=pad2(a_hat, n_pad, n_pad, jnp.bfloat16),
        x=pad2(x, n_pad, f_pad, jnp.bfloat16),
        w1=pad2(w1, f_pad, h_pad, jnp.bfloat16),
        w2=pad2(w2, h_pad, h_pad, jnp.bfloat16),
        w3=pad2(w3, h_pad, c_pad, jnp.bfloat16),
        b1=pad2(b1, 1, h_pad, jnp.float32),
        b2=pad2(b2, 1, h_pad, jnp.float32),
        b3=pad2(b3, 1, c_pad, jnp.float32),
        n=n, n_pad=n_pad, f_pad=f_pad, h_pad=h_pad, c_pad=c_pad,
        num_classes=num_classes, row_tile=row_tile,
        fused=fused, vmem_limit=vmem_limit,
    )


# ---------------------------------------------------------------------------
# Forward: dispatch fused / tiled, slice real (N, num_classes) result out.
# ---------------------------------------------------------------------------
def gcn_forward(prep):
    out_pad = _gcn_forward_fused(prep) if prep["fused"] else _gcn_forward_tiled(prep)
    return out_pad[: prep["n"], : prep["num_classes"]]


def _gcn_forward_fused(prep):
    kernel = functools.partial(gcn_fused_kernel, num_classes=prep["num_classes"])
    return pl.pallas_call(
        kernel,
        out_shape=jax.ShapeDtypeStruct((prep["n_pad"], prep["c_pad"]), jnp.float32),
        compiler_params=pltpu.CompilerParams(vmem_limit_bytes=prep["vmem_limit"]),
    )(
        prep["a"], prep["x"],
        prep["w1"], prep["b1"], prep["w2"], prep["b2"], prep["w3"], prep["b3"],
    )


def _gcn_forward_tiled(prep):
    n_pad, f_pad, h_pad, c_pad = prep["n_pad"], prep["f_pad"], prep["h_pad"], prep["c_pad"]
    row_tile = prep["row_tile"]
    grid = (n_pad // row_tile,)
    cparams = pltpu.CompilerParams(
        dimension_semantics=("parallel",),          # megacore shard on v7x
        vmem_limit_bytes=prep["vmem_limit"],        # 96 MiB v5e/v6e, 48 MiB v7x
    )

    def row_spec(cols):
        return pl.BlockSpec((row_tile, cols), lambda i: (i, 0))

    def resident_spec(rows, cols):
        # Constant index_map -> single-buffer (halves VMEM for resident operands).
        try:
            return pl.BlockSpec((rows, cols), lambda i: (0, 0),
                                pipeline_mode=pl.Buffered(1))
        except TypeError:
            return pl.BlockSpec((rows, cols), lambda i: (0, 0))

    # P1 = X @ W1
    p1 = pl.pallas_call(
        transform_kernel,
        out_shape=jax.ShapeDtypeStruct((n_pad, h_pad), jnp.bfloat16),
        grid=grid,
        in_specs=[row_spec(f_pad), resident_spec(f_pad, h_pad)],
        out_specs=row_spec(h_pad),
        compiler_params=cparams,
    )(prep["x"], prep["w1"])

    # P2 = relu(A_hat @ P1 + b1) @ W2
    p2 = pl.pallas_call(
        agg_transform_kernel,
        out_shape=jax.ShapeDtypeStruct((n_pad, h_pad), jnp.bfloat16),
        grid=grid,
        in_specs=[row_spec(n_pad), resident_spec(n_pad, h_pad),
                  resident_spec(1, h_pad), resident_spec(h_pad, h_pad)],
        out_specs=row_spec(h_pad),
        compiler_params=cparams,
    )(prep["a"], p1, prep["b1"], prep["w2"])

    # P3 = relu(A_hat @ P2 + b2) @ W3
    p3 = pl.pallas_call(
        agg_transform_kernel,
        out_shape=jax.ShapeDtypeStruct((n_pad, c_pad), jnp.bfloat16),
        grid=grid,
        in_specs=[row_spec(n_pad), resident_spec(n_pad, h_pad),
                  resident_spec(1, h_pad), resident_spec(h_pad, c_pad)],
        out_specs=row_spec(c_pad),
        compiler_params=cparams,
    )(prep["a"], p2, prep["b2"], prep["w3"])

    # out = log_softmax(A_hat @ P3 + b3)
    return pl.pallas_call(
        functools.partial(agg_logsoftmax_kernel, num_classes=prep["num_classes"]),
        out_shape=jax.ShapeDtypeStruct((n_pad, c_pad), jnp.float32),
        grid=grid,
        in_specs=[row_spec(n_pad), resident_spec(n_pad, c_pad), resident_spec(1, c_pad)],
        out_specs=row_spec(c_pad),
        compiler_params=cparams,
    )(prep["a"], p3, prep["b3"])


# ---------------------------------------------------------------------------
# Glue: D^-1/2 (A + I) D^-1/2 from edge_index (PyG GCNConv gcn_norm semantics,
# scatter-add so duplicate edges are counted like PyG would).
# ---------------------------------------------------------------------------
def build_normalized_adjacency(edge_index, num_nodes):
    src, dst = edge_index[0], edge_index[1]
    a = jnp.zeros((num_nodes, num_nodes), jnp.float32)
    a = a.at[dst, src].add(1.0)                  # message flows src -> dst
    diag = jnp.arange(num_nodes)
    a = a.at[diag, diag].add(1.0)                # self-loops
    deg = jnp.sum(a, axis=1)
    dinv_sqrt = 1.0 / jnp.sqrt(jnp.maximum(deg, 1.0))
    return a * dinv_sqrt[:, None] * dinv_sqrt[None, :]


# ---------------------------------------------------------------------------
# Glue: deterministic parameter init (glorot weights, zero biases, like PyG).
# ---------------------------------------------------------------------------
def init_gcn_params(key, num_features, hidden, num_classes):
    def glorot(k, fan_in, fan_out):
        limit = jnp.sqrt(6.0 / (fan_in + fan_out))
        return jax.random.uniform(k, (fan_in, fan_out), jnp.float32,
                                  minval=-limit, maxval=limit)

    k1, k2, k3 = jax.random.split(key, 3)
    return ((glorot(k1, num_features, hidden), jnp.zeros((1, hidden), jnp.float32)),
            (glorot(k2, hidden, hidden), jnp.zeros((1, hidden), jnp.float32)),
            (glorot(k3, hidden, num_classes), jnp.zeros((1, num_classes), jnp.float32)))


# ---------------------------------------------------------------------------
# Pure-JAX reference with the same bf16 storage / f32 accumulation.
# ---------------------------------------------------------------------------
def _reference_forward(a_hat, x, params):
    (w1, b1), (w2, b2), (w3, b3) = params
    a = a_hat.astype(jnp.bfloat16)
    h = x.astype(jnp.bfloat16)

    def conv(h_in, w, b):
        p = jnp.dot(h_in, w.astype(jnp.bfloat16),
                    preferred_element_type=jnp.float32).astype(jnp.bfloat16)
        return jnp.dot(a, p, preferred_element_type=jnp.float32) + b

    h = jax.nn.relu(conv(h, w1, b1)).astype(jnp.bfloat16)
    h = jax.nn.relu(conv(h, w2, b2)).astype(jnp.bfloat16)
    h = conv(h, w3, b3)
    return jax.nn.log_softmax(h, axis=1)


if __name__ == "__main__":
    # Synthetic "Cora-like" graph at small shapes.
    NUM_NODES = 64
    NUM_FEATURES = 32      # stands in for dataset.num_node_features
    HIDDEN = 16
    NUM_CLASSES = 8        # stands in for dataset.num_classes
    NUM_EDGES = 128

    key = jax.random.PRNGKey(0)
    k_x, k_src, k_dst, k_params = jax.random.split(key, 4)

    x = jax.random.normal(k_x, (NUM_NODES, NUM_FEATURES), jnp.float32)

    src = jax.random.randint(k_src, (NUM_EDGES,), 0, NUM_NODES)
    dst = jax.random.randint(k_dst, (NUM_EDGES,), 0, NUM_NODES)
    # undirected graph (Cora edge_index is symmetric)
    edge_index = jnp.stack([jnp.concatenate([src, dst]),
                            jnp.concatenate([dst, src])], axis=0)

    a_hat = build_normalized_adjacency(edge_index, NUM_NODES)
    params = init_gcn_params(k_params, NUM_FEATURES, HIDDEN, NUM_CLASSES)

    # One-time graph/weight preparation (padding + bf16 cast hoisted out of forward).
    prep = prepare_gcn(a_hat, x, params, NUM_CLASSES, row_tile=256)
    assert prep["fused"]   # demo / Cora-scale graphs take the single-launch fused path

    out = gcn_forward(prep)
    out = jax.block_until_ready(out)

    assert out.shape == (NUM_NODES, NUM_CLASSES)

    # sanity: log_softmax rows should sum (in prob space) to ~1
    row_prob_sum = jnp.sum(jnp.exp(out), axis=1)
    assert bool(jnp.all(jnp.abs(row_prob_sum - 1.0) < 1e-4))

    # agreement with the plain-JAX bf16 reference
    ref = _reference_forward(a_hat, x, params)
    assert bool(jnp.max(jnp.abs(out - ref)) < 5e-2)

    print("KERNEL_OK")
</pallas_src>

<mosaic_0001>
module attributes {stable_mosaic.version = 11 : i64} {
  func.func @gcn_fused_kernel(%arg0: memref<128x128xbf16, #tpu.memory_space<vmem>>, %arg1: memref<128x128xbf16, #tpu.memory_space<vmem>>, %arg2: memref<128x128xbf16, #tpu.memory_space<vmem>>, %arg3: memref<1x128xf32, #tpu.memory_space<vmem>>, %arg4: memref<128x128xbf16, #tpu.memory_space<vmem>>, %arg5: memref<1x128xf32, #tpu.memory_space<vmem>>, %arg6: memref<128x128xbf16, #tpu.memory_space<vmem>>, %arg7: memref<1x128xf32, #tpu.memory_space<vmem>>, %arg8: memref<128x128xf32, #tpu.memory_space<vmem>>) attributes {dimension_semantics = [], scalar_prefetch = 0 : i64, scratch_operands = 0 : i64, tpu.core_type = #tpu.core_type<tc>} {
    %c0 = arith.constant 0 : index
    %c0_0 = arith.constant 0 : index
    %0 = vector.load %arg0[%c0, %c0_0] : memref<128x128xbf16, #tpu.memory_space<vmem>>, vector<128x128xbf16>
    %c0_1 = arith.constant 0 : index
    %c0_2 = arith.constant 0 : index
    %1 = vector.load %arg1[%c0_1, %c0_2] : memref<128x128xbf16, #tpu.memory_space<vmem>>, vector<128x128xbf16>
    %c0_3 = arith.constant 0 : index
    %c0_4 = arith.constant 0 : index
    %2 = vector.load %arg2[%c0_3, %c0_4] : memref<128x128xbf16, #tpu.memory_space<vmem>>, vector<128x128xbf16>
    %cst = arith.constant dense<0.000000e+00> : vector<128x128xf32>
    %3 = tpu.matmul %1, %2, %cst {dimension_numbers = #tpu.dot_dimension_numbers<[1], [0], [0], [1], [0, 0, 1, 1], [], []>} : vector<128x128xbf16>, vector<128x128xbf16>, vector<128x128xf32> -> vector<128x128xf32>
    %4 = arith.truncf %3 : vector<128x128xf32> to vector<128x128xbf16>
    %cst_5 = arith.constant dense<0.000000e+00> : vector<128x128xf32>
    %5 = tpu.matmul %0, %4, %cst_5 {dimension_numbers = #tpu.dot_dimension_numbers<[1], [0], [0], [1], [0, 0, 1, 1], [], []>} : vector<128x128xbf16>, vector<128x128xbf16>, vector<128x128xf32> -> vector<128x128xf32>
    %c0_6 = arith.constant 0 : index
    %c0_7 = arith.constant 0 : index
    %6 = vector.load %arg3[%c0_6, %c0_7] : memref<1x128xf32, #tpu.memory_space<vmem>>, vector<1x128xf32>
    %7 = vector.broadcast %6 : vector<1x128xf32> to vector<128x128xf32>
    %8 = arith.addf %5, %7 : vector<128x128xf32>
    %cst_8 = arith.constant 0.000000e+00 : f32
    %9 = vector.broadcast %cst_8 : f32 to vector<128x128xf32>
    %10 = arith.maximumf %8, %9 : vector<128x128xf32>
    %11 = arith.truncf %10 : vector<128x128xf32> to vector<128x128xbf16>
    %c0_9 = arith.constant 0 : index
    %c0_10 = arith.constant 0 : index
    %12 = vector.load %arg4[%c0_9, %c0_10] : memref<128x128xbf16, #tpu.memory_space<vmem>>, vector<128x128xbf16>
    %cst_11 = arith.constant dense<0.000000e+00> : vector<128x128xf32>
    %13 = tpu.matmul %11, %12, %cst_11 {dimension_numbers = #tpu.dot_dimension_numbers<[1], [0], [0], [1], [0, 0, 1, 1], [], []>} : vector<128x128xbf16>, vector<128x128xbf16>, vector<128x128xf32> -> vector<128x128xf32>
    %14 = arith.truncf %13 : vector<128x128xf32> to vector<128x128xbf16>
    %cst_12 = arith.constant dense<0.000000e+00> : vector<128x128xf32>
    %15 = tpu.matmul %0, %14, %cst_12 {dimension_numbers = #tpu.dot_dimension_numbers<[1], [0], [0], [1], [0, 0, 1, 1], [], []>} : vector<128x128xbf16>, vector<128x128xbf16>, vector<128x128xf32> -> vector<128x128xf32>
    %c0_13 = arith.constant 0 : index
    %c0_14 = arith.constant 0 : index
    %16 = vector.load %arg5[%c0_13, %c0_14] : memref<1x128xf32, #tpu.memory_space<vmem>>, vector<1x128xf32>
    %17 = vector.broadcast %16 : vector<1x128xf32> to vector<128x128xf32>
    %18 = arith.addf %15, %17 : vector<128x128xf32>
    %cst_15 = arith.constant 0.000000e+00 : f32
    %19 = vector.broadcast %cst_15 : f32 to vector<128x128xf32>
    %20 = arith.maximumf %18, %19 : vector<128x128xf32>
    %21 = arith.truncf %20 : vector<128x128xf32> to vector<128x128xbf16>
    %c0_16 = arith.constant 0 : index
    %c0_17 = arith.constant 0 : index
    %22 = vector.load %arg6[%c0_16, %c0_17] : memref<128x128xbf16, #tpu.memory_space<vmem>>, vector<128x128xbf16>
    %cst_18 = arith.constant dense<0.000000e+00> : vector<128x128xf32>
    %23 = tpu.matmul %21, %22, %cst_18 {dimension_numbers = #tpu.dot_dimension_numbers<[1], [0], [0], [1], [0, 0, 1, 1], [], []>} : vector<128x128xbf16>, vector<128x128xbf16>, vector<128x128xf32> -> vector<128x128xf32>
    %24 = arith.truncf %23 : vector<128x128xf32> to vector<128x128xbf16>
    %cst_19 = arith.constant dense<0.000000e+00> : vector<128x128xf32>
    %25 = tpu.matmul %0, %24, %cst_19 {dimension_numbers = #tpu.dot_dimension_numbers<[1], [0], [0], [1], [0, 0, 1, 1], [], []>} : vector<128x128xbf16>, vector<128x128xbf16>, vector<128x128xf32> -> vector<128x128xf32>
    %c0_20 = arith.constant 0 : index
    %c0_21 = arith.constant 0 : index
    %26 = vector.load %arg7[%c0_20, %c0_21] : memref<1x128xf32, #tpu.memory_space<vmem>>, vector<1x128xf32>
    %27 = vector.broadcast %26 : vector<1x128xf32> to vector<128x128xf32>
    %28 = arith.addf %25, %27 : vector<128x128xf32>
    %29 = tpu.iota {dimensions = array<i32: 1>} : vector<128x128xi32>
    %c8_i32 = arith.constant 8 : i32
    %30 = vector.broadcast %c8_i32 : i32 to vector<128x128xi32>
    %31 = arith.cmpi slt, %29, %30 : vector<128x128xi32>
    %cst_22 = arith.constant -1.000000e+30 : f32
    %32 = vector.broadcast %cst_22 : f32 to vector<128x128xf32>
    %33 = arith.select %31, %28, %32 : vector<128x128xi1>, vector<128x128xf32>
    %cst_23 = arith.constant dense<0xFF800000> : vector<128xf32>
    %34 = vector.multi_reduction <maximumf>, %33, %cst_23 [1] : vector<128x128xf32> to vector<128xf32>
    %35 = vector.shape_cast %34 : vector<128xf32> to vector<128x1xf32>
    %36 = vector.broadcast %35 : vector<128x1xf32> to vector<128x128xf32>
    %37 = arith.subf %33, %36 : vector<128x128xf32>
    %38 = math.exp %37 : vector<128x128xf32>
    %cst_24 = arith.constant dense<0.000000e+00> : vector<128xf32>
    %39 = vector.multi_reduction <add>, %38, %cst_24 [1] : vector<128x128xf32> to vector<128xf32>
    %40 = vector.shape_cast %39 : vector<128xf32> to vector<128x1xf32>
    %41 = math.log %40 : vector<128x1xf32>
    %42 = vector.broadcast %41 : vector<128x1xf32> to vector<128x128xf32>
    %43 = arith.subf %37, %42 : vector<128x128xf32>
    %cst_25 = arith.constant 0.000000e+00 : f32
    %44 = vector.broadcast %cst_25 : f32 to vector<128x128xf32>
    %45 = arith.select %31, %43, %44 : vector<128x128xi1>, vector<128x128xf32>
    %c0_26 = arith.constant 0 : index
    %c0_27 = arith.constant 0 : index
    %46 = vector.load %arg8[%c0_26, %c0_27] : memref<128x128xf32, #tpu.memory_space<vmem>>, vector<128x128xf32>
    tpu.vector_store %arg8[%c0_26, %c0_27], %45 {strides = array<i32>} : memref<128x128xf32, #tpu.memory_space<vmem>>, vector<128x128xf32>,
    return
  }
}

</mosaic_0001>

<llo_original>
// kernel: tpu_custom_call.1
$region0: #{tpu_custom_call.1}
  #allocation0 [shape = 'u32[]', space=smem, size = 0x4, offset = 0x4, fixed_abs, tag = 'smem constant byte address 0x4 - core index']
  #allocation1 [shape = 'u32[144,128]{1,0:T(1,128)}', space=vmem, size = 0x12000, scoped, tag = 'internal scratch']
  %s0 = inlined_call_operand.hbm [shape: bf16[128,128], index: 0, kind: input, shape index: {}]
  %s1 = inlined_call_operand.hbm [shape: bf16[128,128], index: 1, kind: input, shape index: {}]
  %s2 = inlined_call_operand.hbm [shape: bf16[128,128], index: 2, kind: input, shape index: {}]
  %s3 = inlined_call_operand.vmem [shape: f32[1,128], index: 3, kind: input, shape index: {}]
  %s4 = inlined_call_operand.hbm [shape: bf16[128,128], index: 4, kind: input, shape index: {}]
  %s5 = inlined_call_operand.vmem [shape: f32[1,128], index: 5, kind: input, shape index: {}]
  %s6 = inlined_call_operand.hbm [shape: bf16[128,128], index: 6, kind: input, shape index: {}]
  %s7 = inlined_call_operand.vmem [shape: f32[1,128], index: 7, kind: input, shape index: {}]
  %s8 = inlined_call_operand.hbm [shape: f32[128,128], index: 8, kind: output, shape index: {}]
  %s9 = sld [smem:[#allocation0]]
  $region62: #{tpu_custom_call.1} parent=0
    _
  %s11 = ssub.s32 1, %s9
  %s12 = scalar_select 0, %s11, %s9
  $region1: #{tpu_custom_call.1} parent=0
    #allocation2 [shape = 'u8[32768]{0}', space=vmem, size = 0x8000, scoped, tag = 'input window, operand 0, single buffered']
    #allocation3 [shape = 's32[1]{0}', space=sflag, size = 0x4, scoped, tag = 'scoped memory for tpu_custom_call.1']
    #allocation4 [shape = 's32[1]{0}', space=sflag, size = 0x4, scoped, tag = 'scoped memory for tpu_custom_call.1']
    #allocation5 [shape = 'u8[32768]{0}', space=vmem, size = 0x8000, scoped, tag = 'input window, operand 1, single buffered']
    #allocation6 [shape = 's32[1]{0}', space=sflag, size = 0x4, scoped, tag = 'scoped memory for tpu_custom_call.1']
    #allocation7 [shape = 'u8[32768]{0}', space=vmem, size = 0x8000, scoped, tag = 'input window, operand 2, single buffered']
    #allocation8 [shape = 'u8[32768]{0}', space=vmem, size = 0x8000, scoped, tag = 'input window, operand 4, single buffered']
    #allocation9 [shape = 's32[1]{0}', space=sflag, size = 0x4, scoped, tag = 'scoped memory for tpu_custom_call.1']
    #allocation10 [shape = 'u8[32768]{0}', space=vmem, size = 0x8000, scoped, tag = 'input window, operand 6, single buffered']
    #allocation11 [shape = 'u8[65536]{0}', space=vmem, size = 0x10000, scoped, tag = 'output window, operand 0, single buffered']
    %13 = vsyncpa [#allocation3], 0
    %14 = vsyncpa [#allocation6], 0
    %15 = vsyncpa [#allocation9], 0
    %16 = vsyncpa [#allocation4], 0
    // Predicated region
    $region2: #{tpu_custom_call.1} parent=1 // pred_check
      _
    $region3: #{tpu_custom_call.1} parent=1 // pred_check_branch
      %18 = sbr.rel (0) target = $region5
    $region4: #{tpu_custom_call.1} parent=1 // pred_region
      %s20 = ssub.s32 1024, 1024
      %21 = vsyncadd [#allocation3], %s20
      %s22 = sshll.u32 [#allocation2], 4
      %s23 = int_to_ptr.vmem [resolvable:$true] %s22
      %28 = dma.hbm_to_vmem [thread:$0]  %s0, 1024, %s23, [#allocation3], 64, 64, 4
    $region5: #{tpu_custom_call.1} parent=1 // pred_fallthru
      _
    // Predicated region
    $region6: #{tpu_custom_call.1} parent=1 // pred_check
      _
    $region7: #{tpu_custom_call.1} parent=1 // pred_check_branch
      %30 = sbr.rel (0) target = $region9
    $region8: #{tpu_custom_call.1} parent=1 // pred_region
      %s32 = ssub.s32 1024, 1024
      %33 = vsyncadd [#allocation6], %s32
      %s34 = sshll.u32 [#allocation5], 4
      %s35 = int_to_ptr.vmem [resolvable:$true] %s34
      %40 = dma.hbm_to_vmem [thread:$0]  %s1, 1024, %s35, [#allocation6], 64, 64, 4
    $region9: #{tpu_custom_call.1} parent=1 // pred_fallthru
      _
    // Predicated region
    $region10: #{tpu_custom_call.1} parent=1 // pred_check
      _
    $region11: #{tpu_custom_call.1} parent=1 // pred_check_branch
      %42 = sbr.rel (0) target = $region13
    $region12: #{tpu_custom_call.1} parent=1 // pred_region
      %s44 = ssub.s32 1024, 1024
      %45 = vsyncadd [#allocation6], %s44
      %s46 = sshll.u32 [#allocation7], 4
      %s47 = int_to_ptr.vmem [resolvable:$true] %s46
      %52 = dma.hbm_to_vmem [thread:$0]  %s2, 1024, %s47, [#allocation6], 64, 64, 4
    $region13: #{tpu_custom_call.1} parent=1 // pred_fallthru
      _
    // Predicated region
    $region14: #{tpu_custom_call.1} parent=1 // pred_check
      _
    $region15: #{tpu_custom_call.1} parent=1 // pred_check_branch
      %54 = sbr.rel (0) target = $region17
    $region16: #{tpu_custom_call.1} parent=1 // pred_region
      _
    $region17: #{tpu_custom_call.1} parent=1 // pred_fallthru
      _
    // Predicated region
    $region18: #{tpu_custom_call.1} parent=1 // pred_check
      _
    $region19: #{tpu_custom_call.1} parent=1 // pred_check_branch
      %56 = sbr.rel (0) target = $region21
    $region20: #{tpu_custom_call.1} parent=1 // pred_region
      %s58 = ssub.s32 1024, 1024
      %59 = vsyncadd [#allocation9], %s58
      %s60 = sshll.u32 [#allocation8], 4
      %s61 = int_to_ptr.vmem [resolvable:$true] %s60
      %66 = dma.hbm_to_vmem [thread:$0]  %s4, 1024, %s61, [#allocation9], 64, 64, 4
    $region21: #{tpu_custom_call.1} parent=1 // pred_fallthru
      _
    // Predicated region
    $region22: #{tpu_custom_call.1} parent=1 // pred_check
      _
    $region23: #{tpu_custom_call.1} parent=1 // pred_check_branch
      %68 = sbr.rel (0) target = $region25
    $region24: #{tpu_custom_call.1} parent=1 // pred_region
      _
    $region25: #{tpu_custom_call.1} parent=1 // pred_fallthru
      _
    // Predicated region
    $region26: #{tpu_custom_call.1} parent=1 // pred_check
      _
    $region27: #{tpu_custom_call.1} parent=1 // pred_check_branch
      %70 = sbr.rel (0) target = $region29
    $region28: #{tpu_custom_call.1} parent=1 // pred_region
      %s72 = ssub.s32 1024, 1024
      %73 = vsyncadd [#allocation9], %s72
      %s74 = sshll.u32 [#allocation10], 4
      %s75 = int_to_ptr.vmem [resolvable:$true] %s74
      %80 = dma.hbm_to_vmem [thread:$0]  %s6, 1024, %s75, [#allocation9], 64, 64, 4
    $region29: #{tpu_custom_call.1} parent=1 // pred_fallthru
      _
    // Predicated region
    $region30: #{tpu_custom_call.1} parent=1 // pred_check
      _
    $region31: #{tpu_custom_call.1} parent=1 // pred_check_branch
      %82 = sbr.rel (0) target = $region33
    $region32: #{tpu_custom_call.1} parent=1 // pred_region
      _
    $region33: #{tpu_custom_call.1} parent=1 // pred_fallthru
      _
    // Predicated region
    $region34: #{tpu_custom_call.1} parent=1 // pred_check
      _
    $region35: #{tpu_custom_call.1} parent=1 // pred_check_branch
      %84 = sbr.rel (0) target = $region37
    $region36: #{tpu_custom_call.1} parent=1 // pred_region
      %85 = dma.done [#allocation3], 1024
    $region37: #{tpu_custom_call.1} parent=1 // pred_fallthru
      _
    // Predicated region
    $region38: #{tpu_custom_call.1} parent=1 // pred_check
      _
    $region39: #{tpu_custom_call.1} parent=1 // pred_check_branch
      %87 = sbr.rel (0) target = $region41
    $region40: #{tpu_custom_call.1} parent=1 // pred_region
      %88 = dma.done [#allocation6], 1024
    $region41: #{tpu_custom_call.1} parent=1 // pred_fallthru
      _
    // Predicated region
    $region42: #{tpu_custom_call.1} parent=1 // pred_check
      _
    $region43: #{tpu_custom_call.1} parent=1 // pred_check_branch
      %90 = sbr.rel (0) target = $region45
    $region44: #{tpu_custom_call.1} parent=1 // pred_region
      %91 = dma.done [#allocation6], 1024
    $region45: #{tpu_custom_call.1} parent=1 // pred_fallthru
      _
    // Predicated region
    $region46: #{tpu_custom_call.1} parent=1 // pred_check
      _
    $region47: #{tpu_custom_call.1} parent=1 // pred_check_branch
      %93 = sbr.rel (0) target = $region49
    $region48: #{tpu_custom_call.1} parent=1 // pred_region
      %94 = dma.done [#allocation9], 1024
    $region49: #{tpu_custom_call.1} parent=1 // pred_fallthru
      _
    // Predicated region
    $region50: #{tpu_custom_call.1} parent=1 // pred_check
      _
    $region51: #{tpu_custom_call.1} parent=1 // pred_check_branch
      %96 = sbr.rel (0) target = $region53
    $region52: #{tpu_custom_call.1} parent=1 // pred_region
      %97 = dma.done [#allocation9], 1024
    $region53: #{tpu_custom_call.1} parent=1 // pred_fallthru
      _
    %v99 = vld [vmem:[#allocation2] sm:$0xf]
    %v100 = vld [vmem:[#allocation2 + $0x4] sm:$0xf]
    %v101 = vld [vmem:[#allocation2 + $0x8] sm:$0xf]
    %v102 = vld [vmem:[#allocation2 + $0xc] sm:$0xf]
    %v103 = vld [vmem:[#allocation2 + $0x10] sm:$0xf]
    %v104 = vld [vmem:[#allocation2 + $0x14] sm:$0xf]
    %v105 = vld [vmem:[#allocation2 + $0x18] sm:$0xf]
    %v106 = vld [vmem:[#allocation2 + $0x1c] sm:$0xf]
    %v107 = vld [vmem:[#allocation2 + $0x20] sm:$0xf]
    %v108 = vld [vmem:[#allocation2 + $0x24] sm:$0xf]
    %v109 = vld [vmem:[#allocation2 + $0x28] sm:$0xf]
    %v110 = vld [vmem:[#allocation2 + $0x2c] sm:$0xf]
    %v111 = vld [vmem:[#allocation2 + $0x30] sm:$0xf]
    %v112 = vld [vmem:[#allocation2 + $0x34] sm:$0xf]
    %v113 = vld [vmem:[#allocation2 + $0x38] sm:$0xf]
    %v114 = vld [vmem:[#allocation2 + $0x3c] sm:$0xf]
    %v115 = vld [vmem:[#allocation5] sm:$0xf]
    %v116 = vld [vmem:[#allocation5 + $0x4] sm:$0xf]
    %v117 = vld [vmem:[#allocation5 + $0x8] sm:$0xf]
    %v118 = vld [vmem:[#allocation5 + $0xc] sm:$0xf]
    %v119 = vld [vmem:[#allocation5 + $0x10] sm:$0xf]
    %v120 = vld [vmem:[#allocation5 + $0x14] sm:$0xf]
    %v121 = vld [vmem:[#allocation5 + $0x18] sm:$0xf]
    %v122 = vld [vmem:[#allocation5 + $0x1c] sm:$0xf]
    %v123 = vld [vmem:[#allocation5 + $0x20] sm:$0xf]
    %v124 = vld [vmem:[#allocation5 + $0x24] sm:$0xf]
    %v125 = vld [vmem:[#allocation5 + $0x28] sm:$0xf]
    %v126 = vld [vmem:[#allocation5 + $0x2c] sm:$0xf]
    %v127 = vld [vmem:[#allocation5 + $0x30] sm:$0xf]
    %v128 = vld [vmem:[#allocation5 + $0x34] sm:$0xf]
    %v129 = vld [vmem:[#allocation5 + $0x38] sm:$0xf]
    %v130 = vld [vmem:[#allocation5 + $0x3c] sm:$0xf]
    %v131 = vld [vmem:[#allocation7] sm:$0xf]
    %v132 = vld [vmem:[#allocation7 + $0x4] sm:$0xf]
    %v133 = vld [vmem:[#allocation7 + $0x8] sm:$0xf]
    %v134 = vld [vmem:[#allocation7 + $0xc] sm:$0xf]
    %v135 = vld [vmem:[#allocation7 + $0x10] sm:$0xf]
    %v136 = vld [vmem:[#allocation7 + $0x14] sm:$0xf]
    %v137 = vld [vmem:[#allocation7 + $0x18] sm:$0xf]
    %v138 = vld [vmem:[#allocation7 + $0x1c] sm:$0xf]
    %v139 = vld [vmem:[#allocation7 + $0x20] sm:$0xf]
    %v140 = vld [vmem:[#allocation7 + $0x24] sm:$0xf]
    %v141 = vld [vmem:[#allocation7 + $0x28] sm:$0xf]
    %v142 = vld [vmem:[#allocation7 + $0x2c] sm:$0xf]
    %v143 = vld [vmem:[#allocation7 + $0x30] sm:$0xf]
    %v144 = vld [vmem:[#allocation7 + $0x34] sm:$0xf]
    %v145 = vld [vmem:[#allocation7 + $0x38] sm:$0xf]
    %v146 = vld [vmem:[#allocation7 + $0x3c] sm:$0xf]
    %v163 = vunpack.c.l.b16 %v115
    %v164 = vunpack.c.l.b16 %v116
    %v165 = vunpack.c.l.b16 %v117
    %v166 = vunpack.c.l.b16 %v118
    %v167 = vunpack.c.l.b16 %v119
    %v168 = vunpack.c.l.b16 %v120
    %v169 = vunpack.c.l.b16 %v121
    %v170 = vunpack.c.l.b16 %v122
    %v171 = vunpack.c.l.b16 %v123
    %v172 = vunpack.c.l.b16 %v124
    %v173 = vunpack.c.l.b16 %v125
    %v174 = vunpack.c.l.b16 %v126
    %v175 = vunpack.c.l.b16 %v127
    %v176 = vunpack.c.l.b16 %v128
    %v177 = vunpack.c.l.b16 %v129
    %v178 = vunpack.c.l.b16 %v130
    %v179 = vpack.c.b16 %v164, %v163
    %v180 = vpack.c.b16 %v166, %v165
    %v181 = vpack.c.b16 %v168, %v167
    %v182 = vpack.c.b16 %v170, %v169
    %v183 = vpack.c.b16 %v172, %v171
    %v184 = vpack.c.b16 %v174, %v173
    %v185 = vpack.c.b16 %v176, %v175
    %v186 = vpack.c.b16 %v178, %v177
    %v211 = vunpack.c.l.b16 %v131
    %v212 = vunpack.c.l.b16 %v132
    %v213 = vunpack.c.l.b16 %v133
    %v214 = vunpack.c.l.b16 %v134
    %v215 = vunpack.c.l.b16 %v135
    %v216 = vunpack.c.l.b16 %v136
    %v217 = vunpack.c.l.b16 %v137
    %v218 = vunpack.c.l.b16 %v138
    %v219 = vunpack.c.l.b16 %v139
    %v220 = vunpack.c.l.b16 %v140
    %v221 = vunpack.c.l.b16 %v141
    %v222 = vunpack.c.l.b16 %v142
    %v223 = vunpack.c.l.b16 %v143
    %v224 = vunpack.c.l.b16 %v144
    %v225 = vunpack.c.l.b16 %v145
    %v226 = vunpack.c.l.b16 %v146
    %v227 = vpack.c.b16 %v212, %v211
    %v228 = vpack.c.b16 %v214, %v213
    %v229 = vpack.c.b16 %v216, %v215
    %v230 = vpack.c.b16 %v218, %v217
    %v231 = vpack.c.b16 %v220, %v219
    %v232 = vpack.c.b16 %v222, %v221
    %v233 = vpack.c.b16 %v224, %v223
    %v234 = vpack.c.b16 %v226, %v225
    %243 = vmatprep.subr.bf16.mxu0 0
    %244 = vmatpush1.bf16.msra.mxu0 %v227
    %245 = vmatprep.subr.bf16.mxu0 0
    %246 = vmatpush1.bf16.msra.mxu0 %v228
    %247 = vmatprep.subr.bf16.mxu0 0
    %248 = vmatpush1.bf16.msra.mxu0 %v229
    %249 = vmatprep.subr.bf16.mxu0 0
    %250 = vmatpush1.bf16.msra.mxu0 %v230
    %251 = vmatprep.subr.bf16.mxu0 0
    %252 = vmatpush1.bf16.msra.mxu0 %v231
    %253 = vmatprep.subr.bf16.mxu0 0
    %254 = vmatpush1.bf16.msra.mxu0 %v232
    %255 = vmatprep.subr.bf16.mxu0 0
    %256 = vmatpush1.bf16.msra.mxu0 %v233
    %257 = vmatprep.subr.bf16.mxu0 0
    %258 = vmatpush1.bf16.msra.mxu0 %v234
    %259 = vmatprep.subr.bf16.mxu0 0
    %260 = vmatpush1.bf16.msra.mxu0 0
    %261 = vmatprep.subr.bf16.mxu0 0
    %262 = vmatpush1.bf16.msra.mxu0 0
    %263 = vmatprep.subr.bf16.mxu0 0
    %264 = vmatpush1.bf16.msra.mxu0 0
    %265 = vmatprep.subr.bf16.mxu0 0
    %266 = vmatpush1.bf16.msra.mxu0 0
    %267 = vmatprep.subr.bf16.mxu0 0
    %268 = vmatpush1.bf16.msra.mxu0 0
    %269 = vmatprep.subr.bf16.mxu0 0
    %270 = vmatpush1.bf16.msra.mxu0 0
    %271 = vmatprep.subr.bf16.mxu0 0
    %272 = vmatpush1.bf16.msra.mxu0 0
    %273 = vmatprep.subr.bf16.mxu0 0
    %274 = vmatpush1.bf16.msra.mxu0 0
    %275 = vmatprep.mubr.bf16.mxu0 0
    %276 = vmatmul.mubr.bf16.gmra.mrb[0].mxu0 %v179
    %v277 = vpop.f32.mrb[0].mxu0
    %v278 = vadd.f32 0.0, %v277
    %v279 = vpop.f32.mrb[0].mxu0
    %v280 = vpop.f32.mrb[0].mxu0
    %v281 = vadd.f32 0.0, %v280
    %v282 = vpop.f32.mrb[0].mxu0
    %283 = vmatprep.mubr.bf16.mxu0 0
    %284 = vmatmul.mubr.bf16.gmra.mrb[0].mxu0 %v180
    %v285 = vpop.f32.mrb[0].mxu0
    %v286 = vadd.f32 0.0, %v285
    %v287 = vpop.f32.mrb[0].mxu0
    %v288 = vpop.f32.mrb[0].mxu0
    %v289 = vadd.f32 0.0, %v288
    %v290 = vpop.f32.mrb[0].mxu0
    %291 = vmatprep.mubr.bf16.mxu0 0
    %292 = vmatmul.mubr.bf16.gmra.mrb[0].mxu0 %v181
    %v293 = vpop.f32.mrb[0].mxu0
    %v294 = vadd.f32 0.0, %v293
    %v295 = vpop.f32.mrb[0].mxu0
    %v296 = vpop.f32.mrb[0].mxu0
    %v297 = vadd.f32 0.0, %v296
    %v298 = vpop.f32.mrb[0].mxu0
    %299 = vmatprep.mubr.bf16.mxu0 0
    %300 = vmatmul.mubr.bf16.gmra.mrb[0].mxu0 %v182
    %v301 = vpop.f32.mrb[0].mxu0
    %v302 = vadd.f32 0.0, %v301
    %v303 = vpop.f32.mrb[0].mxu0
    %v304 = vpop.f32.mrb[0].mxu0
    %v305 = vadd.f32 0.0, %v304
    %v306 = vpop.f32.mrb[0].mxu0
    %307 = vmatprep.mubr.bf16.mxu0 0
    %308 = vmatmul.mubr.bf16.gmra.mrb[0].mxu0 %v183
    %v309 = vpop.f32.mrb[0].mxu0
    %v310 = vadd.f32 0.0, %v309
    %v311 = vpop.f32.mrb[0].mxu0
    %v312 = vpop.f32.mrb[0].mxu0
    %v313 = vadd.f32 0.0, %v312
    %v314 = vpop.f32.mrb[0].mxu0
    %315 = vmatprep.mubr.bf16.mxu0 0
    %316 = vmatmul.mubr.bf16.gmra.mrb[0].mxu0 %v184
    %v317 = vpop.f32.mrb[0].mxu0
    %v318 = vadd.f32 0.0, %v317
    %v319 = vpop.f32.mrb[0].mxu0
    %v320 = vpop.f32.mrb[0].mxu0
    %v321 = vadd.f32 0.0, %v320
    %v322 = vpop.f32.mrb[0].mxu0
    %323 = vmatprep.mubr.bf16.mxu0 0
    %324 = vmatmul.mubr.bf16.gmra.mrb[0].mxu0 %v185
    %v325 = vpop.f32.mrb[0].mxu0
    %v326 = vadd.f32 0.0, %v325
    %v327 = vpop.f32.mrb[0].mxu0
    %v328 = vpop.f32.mrb[0].mxu0
    %v329 = vadd.f32 0.0, %v328
    %v330 = vpop.f32.mrb[0].mxu0
    %331 = vmatprep.mubr.bf16.mxu0 0
    %332 = vmatmul.mubr.bf16.gmra.mrb[0].mxu0 %v186
    %v333 = vpop.f32.mrb[0].mxu0
    %v334 = vadd.f32 0.0, %v333
    %v335 = vpop.f32.mrb[0].mxu0
    %v336 = vpop.f32.mrb[0].mxu0
    %v337 = vadd.f32 0.0, %v336
    %v338 = vpop.f32.mrb[0].mxu0
    %339 = vdwg.mxu0
    %v340 = vpack.c.bf16 %v281, %v278
    %v341 = vpack.c.bf16 %v289, %v286
    %v342 = vpack.c.bf16 %v297, %v294
    %v343 = vpack.c.bf16 %v305, %v302
    %v344 = vpack.c.bf16 %v313, %v310
    %v345 = vpack.c.bf16 %v321, %v318
    %v346 = vpack.c.bf16 %v329, %v326
    %v347 = vpack.c.bf16 %v337, %v334
    %v348 = vld [vmem:[%s3] sm:$0x1]
    %v350 = vlaneseq
    %v351 = vshrl.u32 %v350, 7
    %v352 = vsub.s32 0, %v351
    %v353 = vrot.slane %v348, %v352
    %v371 = vunpack.c.l.b16 %v99
    %v372 = vunpack.c.l.b16 %v100
    %v373 = vunpack.c.l.b16 %v101
    %v374 = vunpack.c.l.b16 %v102
    %v375 = vunpack.c.l.b16 %v103
    %v376 = vunpack.c.l.b16 %v104
    %v377 = vunpack.c.l.b16 %v105
    %v378 = vunpack.c.l.b16 %v106
    %v379 = vunpack.c.l.b16 %v107
    %v380 = vunpack.c.l.b16 %v108
    %v381 = vunpack.c.l.b16 %v109
    %v382 = vunpack.c.l.b16 %v110
    %v383 = vunpack.c.l.b16 %v111
    %v384 = vunpack.c.l.b16 %v112
    %v385 = vunpack.c.l.b16 %v113
    %v386 = vunpack.c.l.b16 %v114
    %v387 = vpack.c.b16 %v372, %v371
    %v388 = vpack.c.b16 %v374, %v373
    %v389 = vpack.c.b16 %v376, %v375
    %v390 = vpack.c.b16 %v378, %v377
    %v391 = vpack.c.b16 %v380, %v379
    %v392 = vpack.c.b16 %v382, %v381
    %v393 = vpack.c.b16 %v384, %v383
    %v394 = vpack.c.b16 %v386, %v385
    %403 = vmatprep.subr.bf16.mxu0 0
    %404 = vmatpush1.bf16.msra.mxu0 %v340
    %405 = vmatprep.subr.bf16.mxu0 0
    %406 = vmatpush1.bf16.msra.mxu0 %v341
    %407 = vmatprep.subr.bf16.mxu0 0
    %408 = vmatpush1.bf16.msra.mxu0 %v342
    %409 = vmatprep.subr.bf16.mxu0 0
    %410 = vmatpush1.bf16.msra.mxu0 %v343
    %411 = vmatprep.subr.bf16.mxu0 0
    %412 = vmatpush1.bf16.msra.mxu0 %v344
    %413 = vmatprep.subr.bf16.mxu0 0
    %414 = vmatpush1.bf16.msra.mxu0 %v345
    %415 = vmatprep.subr.bf16.mxu0 0
    %416 = vmatpush1.bf16.msra.mxu0 %v346
    %417 = vmatprep.subr.bf16.mxu0 0
    %418 = vmatpush1.bf16.msra.mxu0 %v347
    %419 = vmatprep.subr.bf16.mxu0 0
    %420 = vmatpush1.bf16.msra.mxu0 0
    %421 = vmatprep.subr.bf16.mxu0 0
    %422 = vmatpush1.bf16.msra.mxu0 0
    %423 = vmatprep.subr.bf16.mxu0 0
    %424 = vmatpush1.bf16.msra.mxu0 0
    %425 = vmatprep.subr.bf16.mxu0 0
    %426 = vmatpush1.bf16.msra.mxu0 0
    %427 = vmatprep.subr.bf16.mxu0 0
    %428 = vmatpush1.bf16.msra.mxu0 0
    %429 = vmatprep.subr.bf16.mxu0 0
    %430 = vmatpush1.bf16.msra.mxu0 0
    %431 = vmatprep.subr.bf16.mxu0 0
    %432 = vmatpush1.bf16.msra.mxu0 0
    %433 = vmatprep.subr.bf16.mxu0 0
    %434 = vmatpush1.bf16.msra.mxu0 0
    %435 = vmatprep.mubr.bf16.mxu0 0
    %436 = vmatmul.mubr.bf16.gmra.mrb[0].mxu0 %v387
    %v437 = vpop.f32.mrb[0].mxu0
    %v438 = vadd.f32 %v353, %v437
    %v439 = vpop.f32.mrb[0].mxu0
    %v440 = vpop.f32.mrb[0].mxu0
    %v441 = vadd.f32 %v353, %v440
    %v442 = vpop.f32.mrb[0].mxu0
    %443 = vmatprep.mubr.bf16.mxu0 0
    %444 = vmatmul.mubr.bf16.gmra.mrb[0].mxu0 %v388
    %v445 = vpop.f32.mrb[0].mxu0
    %v446 = vadd.f32 %v353, %v445
    %v447 = vpop.f32.mrb[0].mxu0
    %v448 = vpop.f32.mrb[0].mxu0
    %v449 = vadd.f32 %v353, %v448
    %v450 = vpop.f32.mrb[0].mxu0
    %451 = vmatprep.mubr.bf16.mxu0 0
    %452 = vmatmul.mubr.bf16.gmra.mrb[0].mxu0 %v389
    %v453 = vpop.f32.mrb[0].mxu0
    %v454 = vadd.f32 %v353, %v453
    %v455 = vpop.f32.mrb[0].mxu0
    %v456 = vpop.f32.mrb[0].mxu0
    %v457 = vadd.f32 %v353, %v456
    %v458 = vpop.f32.mrb[0].mxu0
    %459 = vmatprep.mubr.bf16.mxu0 0
    %460 = vmatmul.mubr.bf16.gmra.mrb[0].mxu0 %v390
    %v461 = vpop.f32.mrb[0].mxu0
    %v462 = vadd.f32 %v353, %v461
    %v463 = vpop.f32.mrb[0].mxu0
    %v464 = vpop.f32.mrb[0].mxu0
    %v465 = vadd.f32 %v353, %v464
    %v466 = vpop.f32.mrb[0].mxu0
    %467 = vmatprep.mubr.bf16.mxu0 0
    %468 = vmatmul.mubr.bf16.gmra.mrb[0].mxu0 %v391
    %v469 = vpop.f32.mrb[0].mxu0
    %v470 = vadd.f32 %v353, %v469
    %v471 = vpop.f32.mrb[0].mxu0
    %v472 = vpop.f32.mrb[0].mxu0
    %v473 = vadd.f32 %v353, %v472
    %v474 = vpop.f32.mrb[0].mxu0
    %475 = vmatprep.mubr.bf16.mxu0 0
    %476 = vmatmul.mubr.bf16.gmra.mrb[0].mxu0 %v392
    %v477 = vpop.f32.mrb[0].mxu0
    %v478 = vadd.f32 %v353, %v477
    %v479 = vpop.f32.mrb[0].mxu0
    %v480 = vpop.f32.mrb[0].mxu0
    %v481 = vadd.f32 %v353, %v480
    %v482 = vpop.f32.mrb[0].mxu0
    %483 = vmatprep.mubr.bf16.mxu0 0
    %484 = vmatmul.mubr.bf16.gmra.mrb[0].mxu0 %v393
    %v485 = vpop.f32.mrb[0].mxu0
    %v486 = vadd.f32 %v353, %v485
    %v487 = vpop.f32.mrb[0].mxu0
    %v488 = vpop.f32.mrb[0].mxu0
    %v489 = vadd.f32 %v353, %v488
    %v490 = vpop.f32.mrb[0].mxu0
    %491 = vmatprep.mubr.bf16.mxu0 0
    %492 = vmatmul.mubr.bf16.gmra.mrb[0].mxu0 %v394
    %v493 = vpop.f32.mrb[0].mxu0
    %v494 = vadd.f32 %v353, %v493
    %v495 = vpop.f32.mrb[0].mxu0
    %v496 = vpop.f32.mrb[0].mxu0
    %v497 = vadd.f32 %v353, %v496
    %v498 = vpop.f32.mrb[0].mxu0
    %499 = vdwg.mxu0
    %v500 = vmax.f32 %v438, 0.0
    %v501 = vmax.f32 %v441, 0.0
    %v502 = vmax.f32 %v446, 0.0
    %v503 = vmax.f32 %v449, 0.0
    %v504 = vmax.f32 %v454, 0.0
    %v505 = vmax.f32 %v457, 0.0
    %v506 = vmax.f32 %v462, 0.0
    %v507 = vmax.f32 %v465, 0.0
    %v508 = vmax.f32 %v470, 0.0
    %v509 = vmax.f32 %v473, 0.0
    %v510 = vmax.f32 %v478, 0.0
    %v511 = vmax.f32 %v481, 0.0
    %v512 = vmax.f32 %v486, 0.0
    %v513 = vmax.f32 %v489, 0.0
    %v514 = vmax.f32 %v494, 0.0
    %v515 = vmax.f32 %v497, 0.0
    %v516 = vpack.c.bf16 %v501, %v500
    %v517 = vpack.c.bf16 %v503, %v502
    %v518 = vpack.c.bf16 %v505, %v504
    %v519 = vpack.c.bf16 %v507, %v506
    %v520 = vpack.c.bf16 %v509, %v508
    %v521 = vpack.c.bf16 %v511, %v510
    %v522 = vpack.c.bf16 %v513, %v512
    %v523 = vpack.c.bf16 %v515, %v514
    %v524 = vld [vmem:[#allocation8] sm:$0xf]
    %v525 = vld [vmem:[#allocation8 + $0x4] sm:$0xf]
    %v526 = vld [vmem:[#allocation8 + $0x8] sm:$0xf]
    %v527 = vld [vmem:[#allocation8 + $0xc] sm:$0xf]
    %v528 = vld [vmem:[#allocation8 + $0x10] sm:$0xf]
    %v529 = vld [vmem:[#allocation8 + $0x14] sm:$0xf]
    %v530 = vld [vmem:[#allocation8 + $0x18] sm:$0xf]
    %v531 = vld [vmem:[#allocation8 + $0x1c] sm:$0xf]
    %v532 = vld [vmem:[#allocation8 + $0x20] sm:$0xf]
    %v533 = vld [vmem:[#allocation8 + $0x24] sm:$0xf]
    %v534 = vld [vmem:[#allocation8 + $0x28] sm:$0xf]
    %v535 = vld [vmem:[#allocation8 + $0x2c] sm:$0xf]
    %v536 = vld [vmem:[#allocation8 + $0x30] sm:$0xf]
    %v537 = vld [vmem:[#allocation8 + $0x34] sm:$0xf]
    %v538 = vld [vmem:[#allocation8 + $0x38] sm:$0xf]
    %v539 = vld [vmem:[#allocation8 + $0x3c] sm:$0xf]
    %v556 = vunpack.c.l.b16 %v524
    %v557 = vunpack.c.l.b16 %v525
    %v558 = vunpack.c.l.b16 %v526
    %v559 = vunpack.c.l.b16 %v527
    %v560 = vunpack.c.l.b16 %v528
    %v561 = vunpack.c.l.b16 %v529
    %v562 = vunpack.c.l.b16 %v530
    %v563 = vunpack.c.l.b16 %v531
    %v564 = vunpack.c.l.b16 %v532
    %v565 = vunpack.c.l.b16 %v533
    %v566 = vunpack.c.l.b16 %v534
    %v567 = vunpack.c.l.b16 %v535
    %v568 = vunpack.c.l.b16 %v536
    %v569 = vunpack.c.l.b16 %v537
    %v570 = vunpack.c.l.b16 %v538
    %v571 = vunpack.c.l.b16 %v539
    %v572 = vpack.c.b16 %v557, %v556
    %v573 = vpack.c.b16 %v559, %v558
    %v574 = vpack.c.b16 %v561, %v560
    %v575 = vpack.c.b16 %v563, %v562
    %v576 = vpack.c.b16 %v565, %v564
    %v577 = vpack.c.b16 %v567, %v566
    %v578 = vpack.c.b16 %v569, %v568
    %v579 = vpack.c.b16 %v571, %v570
    %588 = vmatprep.subr.bf16.mxu0 0
    %589 = vmatpush1.bf16.msra.mxu0 %v572
    %590 = vmatprep.subr.bf16.mxu0 0
    %591 = vmatpush1.bf16.msra.mxu0 %v573
    %592 = vmatprep.subr.bf16.mxu0 0
    %593 = vmatpush1.bf16.msra.mxu0 %v574
    %594 = vmatprep.subr.bf16.mxu0 0
    %595 = vmatpush1.bf16.msra.mxu0 %v575
    %596 = vmatprep.subr.bf16.mxu0 0
    %597 = vmatpush1.bf16.msra.mxu0 %v576
    %598 = vmatprep.subr.bf16.mxu0 0
    %599 = vmatpush1.bf16.msra.mxu0 %v577
    %600 = vmatprep.subr.bf16.mxu0 0
    %601 = vmatpush1.bf16.msra.mxu0 %v578
    %602 = vmatprep.subr.bf16.mxu0 0
    %603 = vmatpush1.bf16.msra.mxu0 %v579
    %604 = vmatprep.subr.bf16.mxu0 0
    %605 = vmatpush1.bf16.msra.mxu0 0
    %606 = vmatprep.subr.bf16.mxu0 0
    %607 = vmatpush1.bf16.msra.mxu0 0
    %608 = vmatprep.subr.bf16.mxu0 0
    %609 = vmatpush1.bf16.msra.mxu0 0
    %610 = vmatprep.subr.bf16.mxu0 0
    %611 = vmatpush1.bf16.msra.mxu0 0
    %612 = vmatprep.subr.bf16.mxu0 0
    %613 = vmatpush1.bf16.msra.mxu0 0
    %614 = vmatprep.subr.bf16.mxu0 0
    %615 = vmatpush1.bf16.msra.mxu0 0
    %616 = vmatprep.subr.bf16.mxu0 0
    %617 = vmatpush1.bf16.msra.mxu0 0
    %618 = vmatprep.subr.bf16.mxu0 0
    %619 = vmatpush1.bf16.msra.mxu0 0
    %620 = vmatprep.mubr.bf16.mxu0 0
    %621 = vmatmul.mubr.bf16.gmra.mrb[0].mxu0 %v516
    %v622 = vpop.f32.mrb[0].mxu0
    %v623 = vadd.f32 0.0, %v622
    %v624 = vpop.f32.mrb[0].mxu0
    %v625 = vpop.f32.mrb[0].mxu0
    %v626 = vadd.f32 0.0, %v625
    %v627 = vpop.f32.mrb[0].mxu0
    %628 = vmatprep.mubr.bf16.mxu0 0
    %629 = vmatmul.mubr.bf16.gmra.mrb[0].mxu0 %v517
    %v630 = vpop.f32.mrb[0].mxu0
    %v631 = vadd.f32 0.0, %v630
    %v632 = vpop.f32.mrb[0].mxu0
    %v633 = vpop.f32.mrb[0].mxu0
    %v634 = vadd.f32 0.0, %v633
    %v635 = vpop.f32.mrb[0].mxu0
    %636 = vmatprep.mubr.bf16.mxu0 0
    %637 = vmatmul.mubr.bf16.gmra.mrb[0].mxu0 %v518
    %v638 = vpop.f32.mrb[0].mxu0
    %v639 = vadd.f32 0.0, %v638
    %v640 = vpop.f32.mrb[0].mxu0
    %v641 = vpop.f32.mrb[0].mxu0
    %v642 = vadd.f32 0.0, %v641
    %v643 = vpop.f32.mrb[0].mxu0
    %644 = vmatprep.mubr.bf16.mxu0 0
    %645 = vmatmul.mubr.bf16.gmra.mrb[0].mxu0 %v519
    %v646 = vpop.f32.mrb[0].mxu0
    %v647 = vadd.f32 0.0, %v646
    %v648 = vpop.f32.mrb[0].mxu0
    %v649 = vpop.f32.mrb[0].mxu0
    %v650 = vadd.f32 0.0, %v649
    %v651 = vpop.f32.mrb[0].mxu0
    %652 = vmatprep.mubr.bf16.mxu0 0
    %653 = vmatmul.mubr.bf16.gmra.mrb[0].mxu0 %v520
    %v654 = vpop.f32.mrb[0].mxu0
    %v655 = vadd.f32 0.0, %v654
    %v656 = vpop.f32.mrb[0].mxu0
    %v657 = vpop.f32.mrb[0].mxu0
    %v658 = vadd.f32 0.0, %v657
    %v659 = vpop.f32.mrb[0].mxu0
    %660 = vmatprep.mubr.bf16.mxu0 0
    %661 = vmatmul.mubr.bf16.gmra.mrb[0].mxu0 %v521
    %v662 = vpop.f32.mrb[0].mxu0
    %v663 = vadd.f32 0.0, %v662
    %v664 = vpop.f32.mrb[0].mxu0
    %v665 = vpop.f32.mrb[0].mxu0
    %v666 = vadd.f32 0.0, %v665
    %v667 = vpop.f32.mrb[0].mxu0
    %668 = vmatprep.mubr.bf16.mxu0 0
    %669 = vmatmul.mubr.bf16.gmra.mrb[0].mxu0 %v522
    %v670 = vpop.f32.mrb[0].mxu0
    %v671 = vadd.f32 0.0, %v670
    %v672 = vpop.f32.mrb[0].mxu0
    %v673 = vpop.f32.mrb[0].mxu0
    %v674 = vadd.f32 0.0, %v673
    %v675 = vpop.f32.mrb[0].mxu0
    %676 = vmatprep.mubr.bf16.mxu0 0
    %677 = vmatmul.mubr.bf16.gmra.mrb[0].mxu0 %v523
    %v678 = vpop.f32.mrb[0].mxu0
    %v679 = vadd.f32 0.0, %v678
    %v680 = vpop.f32.mrb[0].mxu0
    %v681 = vpop.f32.mrb[0].mxu0
    %v682 = vadd.f32 0.0, %v681
    %v683 = vpop.f32.mrb[0].mxu0
    %684 = vdwg.mxu0
    %v685 = vpack.c.bf16 %v626, %v623
    %v686 = vpack.c.bf16 %v634, %v631
    %v687 = vpack.c.bf16 %v642, %v639
    %v688 = vpack.c.bf16 %v650, %v647
    %v689 = vpack.c.bf16 %v658, %v655
    %v690 = vpack.c.bf16 %v666, %v663
    %v691 = vpack.c.bf16 %v674, %v671
    %v692 = vpack.c.bf16 %v682, %v679
    %v693 = vld [vmem:[%s5] sm:$0x1]
    %v695 = vlaneseq
    %v696 = vshrl.u32 %v695, 7
    %v697 = vsub.s32 0, %v696
    %v698 = vrot.slane %v693, %v697
    %700 = vmatprep.subr.bf16.mxu0 0
    %701 = vmatpush1.bf16.msra.mxu0 %v685
    %702 = vmatprep.subr.bf16.mxu0 0
    %703 = vmatpush1.bf16.msra.mxu0 %v686
    %704 = vmatprep.subr.bf16.mxu0 0
    %705 = vmatpush1.bf16.msra.mxu0 %v687
    %706 = vmatprep.subr.bf16.mxu0 0
    %707 = vmatpush1.bf16.msra.mxu0 %v688
    %708 = vmatprep.subr.bf16.mxu0 0
    %709 = vmatpush1.bf16.msra.mxu0 %v689
    %710 = vmatprep.subr.bf16.mxu0 0
    %711 = vmatpush1.bf16.msra.mxu0 %v690
    %712 = vmatprep.subr.bf16.mxu0 0
    %713 = vmatpush1.bf16.msra.mxu0 %v691
    %714 = vmatprep.subr.bf16.mxu0 0
    %715 = vmatpush1.bf16.msra.mxu0 %v692
    %716 = vmatprep.subr.bf16.mxu0 0
    %717 = vmatpush1.bf16.msra.mxu0 0
    %718 = vmatprep.subr.bf16.mxu0 0
    %719 = vmatpush1.bf16.msra.mxu0 0
    %720 = vmatprep.subr.bf16.mxu0 0
    %721 = vmatpush1.bf16.msra.mxu0 0
    %722 = vmatprep.subr.bf16.mxu0 0
    %723 = vmatpush1.bf16.msra.mxu0 0
    %724 = vmatprep.subr.bf16.mxu0 0
    %725 = vmatpush1.bf16.msra.mxu0 0
    %726 = vmatprep.subr.bf16.mxu0 0
    %727 = vmatpush1.bf16.msra.mxu0 0
    %728 = vmatprep.subr.bf16.mxu0 0
    %729 = vmatpush1.bf16.msra.mxu0 0
    %730 = vmatprep.subr.bf16.mxu0 0
    %731 = vmatpush1.bf16.msra.mxu0 0
    %732 = vmatprep.mubr.bf16.mxu0 0
    %733 = vmatmul.mubr.bf16.gmra.mrb[0].mxu0 %v387
    %v734 = vpop.f32.mrb[0].mxu0
    %v735 = vadd.f32 %v698, %v734
    %v736 = vpop.f32.mrb[0].mxu0
    %v737 = vpop.f32.mrb[0].mxu0
    %v738 = vadd.f32 %v698, %v737
    %v739 = vpop.f32.mrb[0].mxu0
    %740 = vmatprep.mubr.bf16.mxu0 0
    %741 = vmatmul.mubr.bf16.gmra.mrb[0].mxu0 %v388
    %v742 = vpop.f32.mrb[0].mxu0
    %v743 = vadd.f32 %v698, %v742
    %v744 = vpop.f32.mrb[0].mxu0
    %v745 = vpop.f32.mrb[0].mxu0
    %v746 = vadd.f32 %v698, %v745
    %v747 = vpop.f32.mrb[0].mxu0
    %748 = vmatprep.mubr.bf16.mxu0 0
    %749 = vmatmul.mubr.bf16.gmra.mrb[0].mxu0 %v389
    %v750 = vpop.f32.mrb[0].mxu0
    %v751 = vadd.f32 %v698, %v750
    %v752 = vpop.f32.mrb[0].mxu0
    %v753 = vpop.f32.mrb[0].mxu0
    %v754 = vadd.f32 %v698, %v753
    %v755 = vpop.f32.mrb[0].mxu0
    %756 = vmatprep.mubr.bf16.mxu0 0
    %757 = vmatmul.mubr.bf16.gmra.mrb[0].mxu0 %v390
    %v758 = vpop.f32.mrb[0].mxu0
    %v759 = vadd.f32 %v698, %v758
    %v760 = vpop.f32.mrb[0].mxu0
    %v761 = vpop.f32.mrb[0].mxu0
    %v762 = vadd.f32 %v698, %v761
    %v763 = vpop.f32.mrb[0].mxu0
    %764 = vmatprep.mubr.bf16.mxu0 0
    %765 = vmatmul.mubr.bf16.gmra.mrb[0].mxu0 %v391
    %v766 = vpop.f32.mrb[0].mxu0
    %v767 = vadd.f32 %v698, %v766
    %v768 = vpop.f32.mrb[0].mxu0
    %v769 = vpop.f32.mrb[0].mxu0
    %v770 = vadd.f32 %v698, %v769
    %v771 = vpop.f32.mrb[0].mxu0
    %772 = vmatprep.mubr.bf16.mxu0 0
    %773 = vmatmul.mubr.bf16.gmra.mrb[0].mxu0 %v392
    %v774 = vpop.f32.mrb[0].mxu0
    %v775 = vadd.f32 %v698, %v774
    %v776 = vpop.f32.mrb[0].mxu0
    %v777 = vpop.f32.mrb[0].mxu0
    %v778 = vadd.f32 %v698, %v777
    %v779 = vpop.f32.mrb[0].mxu0
    %780 = vmatprep.mubr.bf16.mxu0 0
    %781 = vmatmul.mubr.bf16.gmra.mrb[0].mxu0 %v393
    %v782 = vpop.f32.mrb[0].mxu0
    %v783 = vadd.f32 %v698, %v782
    %v784 = vpop.f32.mrb[0].mxu0
    %v785 = vpop.f32.mrb[0].mxu0
    %v786 = vadd.f32 %v698, %v785
    %v787 = vpop.f32.mrb[0].mxu0
    %788 = vmatprep.mubr.bf16.mxu0 0
    %789 = vmatmul.mubr.bf16.gmra.mrb[0].mxu0 %v394
    %v790 = vpop.f32.mrb[0].mxu0
    %v791 = vadd.f32 %v698, %v790
    %v792 = vpop.f32.mrb[0].mxu0
    %v793 = vpop.f32.mrb[0].mxu0
    %v794 = vadd.f32 %v698, %v793
    %v795 = vpop.f32.mrb[0].mxu0
    %796 = vdwg.mxu0
    %v797 = vmax.f32 %v735, 0.0
    %v798 = vmax.f32 %v738, 0.0
    %v799 = vmax.f32 %v743, 0.0
    %v800 = vmax.f32 %v746, 0.0
    %v801 = vmax.f32 %v751, 0.0
    %v802 = vmax.f32 %v754, 0.0
    %v803 = vmax.f32 %v759, 0.0
    %v804 = vmax.f32 %v762, 0.0
    %v805 = vmax.f32 %v767, 0.0
    %v806 = vmax.f32 %v770, 0.0
    %v807 = vmax.f32 %v775, 0.0
    %v808 = vmax.f32 %v778, 0.0
    %v809 = vmax.f32 %v783, 0.0
    %v810 = vmax.f32 %v786, 0.0
    %v811 = vmax.f32 %v791, 0.0
    %v812 = vmax.f32 %v794, 0.0
    %v813 = vpack.c.bf16 %v798, %v797
    %v814 = vpack.c.bf16 %v800, %v799
    %v815 = vpack.c.bf16 %v802, %v801
    %v816 = vpack.c.bf16 %v804, %v803
    %v817 = vpack.c.bf16 %v806, %v805
    %v818 = vpack.c.bf16 %v808, %v807
    %v819 = vpack.c.bf16 %v810, %v809
    %v820 = vpack.c.bf16 %v812, %v811
    %v821 = vld [vmem:[#allocation10] sm:$0xf]
    %v822 = vld [vmem:[#allocation10 + $0x4] sm:$0xf]
    %v823 = vld [vmem:[#allocation10 + $0x8] sm:$0xf]
    %v824 = vld [vmem:[#allocation10 + $0xc] sm:$0xf]
    %v825 = vld [vmem:[#allocation10 + $0x10] sm:$0xf]
    %v826 = vld [vmem:[#allocation10 + $0x14] sm:$0xf]
    %v827 = vld [vmem:[#allocation10 + $0x18] sm:$0xf]
    %v828 = vld [vmem:[#allocation10 + $0x1c] sm:$0xf]
    %v829 = vld [vmem:[#allocation10 + $0x20] sm:$0xf]
    %v830 = vld [vmem:[#allocation10 + $0x24] sm:$0xf]
    %v831 = vld [vmem:[#allocation10 + $0x28] sm:$0xf]
    %v832 = vld [vmem:[#allocation10 + $0x2c] sm:$0xf]
    %v833 = vld [vmem:[#allocation10 + $0x30] sm:$0xf]
    %v834 = vld [vmem:[#allocation10 + $0x34] sm:$0xf]
    %v835 = vld [vmem:[#allocation10 + $0x38] sm:$0xf]
    %v836 = vld [vmem:[#allocation10 + $0x3c] sm:$0xf]
    %v853 = vunpack.c.l.b16 %v821
    %v854 = vunpack.c.l.b16 %v822
    %v855 = vunpack.c.l.b16 %v823
    %v856 = vunpack.c.l.b16 %v824
    %v857 = vunpack.c.l.b16 %v825
    %v858 = vunpack.c.l.b16 %v826
    %v859 = vunpack.c.l.b16 %v827
    %v860 = vunpack.c.l.b16 %v828
    %v861 = vunpack.c.l.b16 %v829
    %v862 = vunpack.c.l.b16 %v830
    %v863 = vunpack.c.l.b16 %v831
    %v864 = vunpack.c.l.b16 %v832
    %v865 = vunpack.c.l.b16 %v833
    %v866 = vunpack.c.l.b16 %v834
    %v867 = vunpack.c.l.b16 %v835
    %v868 = vunpack.c.l.b16 %v836
    %v869 = vpack.c.b16 %v854, %v853
    %v870 = vpack.c.b16 %v856, %v855
    %v871 = vpack.c.b16 %v858, %v857
    %v872 = vpack.c.b16 %v860, %v859
    %v873 = vpack.c.b16 %v862, %v861
    %v874 = vpack.c.b16 %v864, %v863
    %v875 = vpack.c.b16 %v866, %v865
    %v876 = vpack.c.b16 %v868, %v867
    %885 = vmatprep.subr.bf16.mxu0 0
    %886 = vmatpush1.bf16.msra.mxu0 %v869
    %887 = vmatprep.subr.bf16.mxu0 0
    %888 = vmatpush1.bf16.msra.mxu0 %v870
    %889 = vmatprep.subr.bf16.mxu0 0
    %890 = vmatpush1.bf16.msra.mxu0 %v871
    %891 = vmatprep.subr.bf16.mxu0 0
    %892 = vmatpush1.bf16.msra.mxu0 %v872
    %893 = vmatprep.subr.bf16.mxu0 0
    %894 = vmatpush1.bf16.msra.mxu0 %v873
    %895 = vmatprep.subr.bf16.mxu0 0
    %896 = vmatpush1.bf16.msra.mxu0 %v874
    %897 = vmatprep.subr.bf16.mxu0 0
    %898 = vmatpush1.bf16.msra.mxu0 %v875
    %899 = vmatprep.subr.bf16.mxu0 0
    %900 = vmatpush1.bf16.msra.mxu0 %v876
    %901 = vmatprep.subr.bf16.mxu0 0
    %902 = vmatpush1.bf16.msra.mxu0 0
    %903 = vmatprep.subr.bf16.mxu0 0
    %904 = vmatpush1.bf16.msra.mxu0 0
    %905 = vmatprep.subr.bf16.mxu0 0
    %906 = vmatpush1.bf16.msra.mxu0 0
    %907 = vmatprep.subr.bf16.mxu0 0
    %908 = vmatpush1.bf16.msra.mxu0 0
    %909 = vmatprep.subr.bf16.mxu0 0
    %910 = vmatpush1.bf16.msra.mxu0 0
    %911 = vmatprep.subr.bf16.mxu0 0
    %912 = vmatpush1.bf16.msra.mxu0 0
    %913 = vmatprep.subr.bf16.mxu0 0
    %914 = vmatpush1.bf16.msra.mxu0 0
    %915 = vmatprep.subr.bf16.mxu0 0
    %916 = vmatpush1.bf16.msra.mxu0 0
    %917 = vmatprep.mubr.bf16.mxu0 0
    %918 = vmatmul.mubr.bf16.gmra.mrb[0].mxu0 %v813
    %v919 = vpop.f32.mrb[0].mxu0
    %v920 = vadd.f32 0.0, %v919
    %v921 = vpop.f32.mrb[0].mxu0
    %v922 = vpop.f32.mrb[0].mxu0
    %v923 = vadd.f32 0.0, %v922
    %v924 = vpop.f32.mrb[0].mxu0
    %925 = vmatprep.mubr.bf16.mxu0 0
    %926 = vmatmul.mubr.bf16.gmra.mrb[0].mxu0 %v814
    %v927 = vpop.f32.mrb[0].mxu0
    %v928 = vadd.f32 0.0, %v927
    %v929 = vpop.f32.mrb[0].mxu0
    %v930 = vpop.f32.mrb[0].mxu0
    %v931 = vadd.f32 0.0, %v930
    %v932 = vpop.f32.mrb[0].mxu0
    %933 = vmatprep.mubr.bf16.mxu0 0
    %934 = vmatmul.mubr.bf16.gmra.mrb[0].mxu0 %v815
    %v935 = vpop.f32.mrb[0].mxu0
    %v936 = vadd.f32 0.0, %v935
    %v937 = vpop.f32.mrb[0].mxu0
    %v938 = vpop.f32.mrb[0].mxu0
    %v939 = vadd.f32 0.0, %v938
    %v940 = vpop.f32.mrb[0].mxu0
    %941 = vmatprep.mubr.bf16.mxu0 0
    %942 = vmatmul.mubr.bf16.gmra.mrb[0].mxu0 %v816
    %v943 = vpop.f32.mrb[0].mxu0
    %v944 = vadd.f32 0.0, %v943
    %v945 = vpop.f32.mrb[0].mxu0
    %v946 = vpop.f32.mrb[0].mxu0
    %v947 = vadd.f32 0.0, %v946
    %v948 = vpop.f32.mrb[0].mxu0
    %949 = vmatprep.mubr.bf16.mxu0 0
    %950 = vmatmul.mubr.bf16.gmra.mrb[0].mxu0 %v817
    %v951 = vpop.f32.mrb[0].mxu0
    %v952 = vadd.f32 0.0, %v951
    %v953 = vpop.f32.mrb[0].mxu0
    %v954 = vpop.f32.mrb[0].mxu0
    %v955 = vadd.f32 0.0, %v954
    %v956 = vpop.f32.mrb[0].mxu0
    %957 = vmatprep.mubr.bf16.mxu0 0
    %958 = vmatmul.mubr.bf16.gmra.mrb[0].mxu0 %v818
    %v959 = vpop.f32.mrb[0].mxu0
    %v960 = vadd.f32 0.0, %v959
    %v961 = vpop.f32.mrb[0].mxu0
    %v962 = vpop.f32.mrb[0].mxu0
    %v963 = vadd.f32 0.0, %v962
    %v964 = vpop.f32.mrb[0].mxu0
    %965 = vmatprep.mubr.bf16.mxu0 0
    %966 = vmatmul.mubr.bf16.gmra.mrb[0].mxu0 %v819
    %v967 = vpop.f32.mrb[0].mxu0
    %v968 = vadd.f32 0.0, %v967
    %v969 = vpop.f32.mrb[0].mxu0
    %v970 = vpop.f32.mrb[0].mxu0
    %v971 = vadd.f32 0.0, %v970
    %v972 = vpop.f32.mrb[0].mxu0
    %973 = vmatprep.mubr.bf16.mxu0 0
    %974 = vmatmul.mubr.bf16.gmra.mrb[0].mxu0 %v820
    %v975 = vpop.f32.mrb[0].mxu0
    %v976 = vadd.f32 0.0, %v975
    %v977 = vpop.f32.mrb[0].mxu0
    %v978 = vpop.f32.mrb[0].mxu0
    %v979 = vadd.f32 0.0, %v978
    %v980 = vpop.f32.mrb[0].mxu0
    %981 = vdwg.mxu0
    %v982 = vpack.c.bf16 %v923, %v920
    %v983 = vpack.c.bf16 %v931, %v928
    %v984 = vpack.c.bf16 %v939, %v936
    %v985 = vpack.c.bf16 %v947, %v944
    %v986 = vpack.c.bf16 %v955, %v952
    %v987 = vpack.c.bf16 %v963, %v960
    %v988 = vpack.c.bf16 %v971, %v968
    %v989 = vpack.c.bf16 %v979, %v976
    %v990 = vld [vmem:[%s7] sm:$0x1]
    %v992 = vlaneseq
    %v993 = vshrl.u32 %v992, 7
    %v994 = vsub.s32 0, %v993
    %v995 = vrot.slane %v990, %v994
    %997 = vmatprep.subr.bf16.mxu0 0
    %998 = vmatpush1.bf16.msra.mxu0 %v982
    %999 = vmatprep.subr.bf16.mxu0 0
    %1000 = vmatpush1.bf16.msra.mxu0 %v983
    %1001 = vmatprep.subr.bf16.mxu0 0
    %1002 = vmatpush1.bf16.msra.mxu0 %v984
    %1003 = vmatprep.subr.bf16.mxu0 0
    %1004 = vmatpush1.bf16.msra.mxu0 %v985
    %1005 = vmatprep.subr.bf16.mxu0 0
    %1006 = vmatpush1.bf16.msra.mxu0 %v986
    %1007 = vmatprep.subr.bf16.mxu0 0
    %1008 = vmatpush1.bf16.msra.mxu0 %v987
    %1009 = vmatprep.subr.bf16.mxu0 0
    %1010 = vmatpush1.bf16.msra.mxu0 %v988
    %1011 = vmatprep.subr.bf16.mxu0 0
    %1012 = vmatpush1.bf16.msra.mxu0 %v989
    %1013 = vmatprep.subr.bf16.mxu0 0
    %1014 = vmatpush1.bf16.msra.mxu0 0
    %1015 = vmatprep.subr.bf16.mxu0 0
    %1016 = vmatpush1.bf16.msra.mxu0 0
    %1017 = vmatprep.subr.bf16.mxu0 0
    %1018 = vmatpush1.bf16.msra.mxu0 0
    %1019 = vmatprep.subr.bf16.mxu0 0
    %1020 = vmatpush1.bf16.msra.mxu0 0
    %1021 = vmatprep.subr.bf16.mxu0 0
    %1022 = vmatpush1.bf16.msra.mxu0 0
    %1023 = vmatprep.subr.bf16.mxu0 0
    %1024 = vmatpush1.bf16.msra.mxu0 0
    %1025 = vmatprep.subr.bf16.mxu0 0
    %1026 = vmatpush1.bf16.msra.mxu0 0
    %1027 = vmatprep.subr.bf16.mxu0 0
    %1028 = vmatpush1.bf16.msra.mxu0 0
    %1029 = vmatprep.mubr.bf16.mxu0 0
    %1030 = vmatmul.mubr.bf16.gmra.mrb[0].mxu0 %v387
    %v1031 = vpop.f32.mrb[0].mxu0
    %v1032 = vadd.f32 %v995, %v1031
    %v1033 = vpop.f32.mrb[0].mxu0
    %v1034 = vpop.f32.mrb[0].mxu0
    %v1035 = vadd.f32 %v995, %v1034
    %v1036 = vpop.f32.mrb[0].mxu0
    %1037 = vmatprep.mubr.bf16.mxu0 0
    %1038 = vmatmul.mubr.bf16.gmra.mrb[0].mxu0 %v388
    %v1039 = vpop.f32.mrb[0].mxu0
    %v1040 = vadd.f32 %v995, %v1039
    %v1041 = vpop.f32.mrb[0].mxu0
    %v1042 = vpop.f32.mrb[0].mxu0
    %v1043 = vadd.f32 %v995, %v1042
    %v1044 = vpop.f32.mrb[0].mxu0
    %1045 = vmatprep.mubr.bf16.mxu0 0
    %1046 = vmatmul.mubr.bf16.gmra.mrb[0].mxu0 %v389
    %v1047 = vpop.f32.mrb[0].mxu0
    %v1048 = vadd.f32 %v995, %v1047
    %v1049 = vpop.f32.mrb[0].mxu0
    %v1050 = vpop.f32.mrb[0].mxu0
    %v1051 = vadd.f32 %v995, %v1050
    %v1052 = vpop.f32.mrb[0].mxu0
    %1053 = vmatprep.mubr.bf16.mxu0 0
    %1054 = vmatmul.mubr.bf16.gmra.mrb[0].mxu0 %v390
    %v1055 = vpop.f32.mrb[0].mxu0
    %v1056 = vadd.f32 %v995, %v1055
    %v1057 = vpop.f32.mrb[0].mxu0
    %v1058 = vpop.f32.mrb[0].mxu0
    %v1059 = vadd.f32 %v995, %v1058
    %v1060 = vpop.f32.mrb[0].mxu0
    %1061 = vmatprep.mubr.bf16.mxu0 0
    %1062 = vmatmul.mubr.bf16.gmra.mrb[0].mxu0 %v391
    %v1063 = vpop.f32.mrb[0].mxu0
    %v1064 = vadd.f32 %v995, %v1063
    %v1065 = vpop.f32.mrb[0].mxu0
    %v1066 = vpop.f32.mrb[0].mxu0
    %v1067 = vadd.f32 %v995, %v1066
    %v1068 = vpop.f32.mrb[0].mxu0
    %1069 = vmatprep.mubr.bf16.mxu0 0
    %1070 = vmatmul.mubr.bf16.gmra.mrb[0].mxu0 %v392
    %v1071 = vpop.f32.mrb[0].mxu0
    %v1072 = vadd.f32 %v995, %v1071
    %v1073 = vpop.f32.mrb[0].mxu0
    %v1074 = vpop.f32.mrb[0].mxu0
    %v1075 = vadd.f32 %v995, %v1074
    %v1076 = vpop.f32.mrb[0].mxu0
    %1077 = vmatprep.mubr.bf16.mxu0 0
    %1078 = vmatmul.mubr.bf16.gmra.mrb[0].mxu0 %v393
    %v1079 = vpop.f32.mrb[0].mxu0
    %v1080 = vadd.f32 %v995, %v1079
    %v1081 = vpop.f32.mrb[0].mxu0
    %v1082 = vpop.f32.mrb[0].mxu0
    %v1083 = vadd.f32 %v995, %v1082
    %v1084 = vpop.f32.mrb[0].mxu0
    %1085 = vmatprep.mubr.bf16.mxu0 0
    %1086 = vmatmul.mubr.bf16.gmra.mrb[0].mxu0 %v394
    %v1087 = vpop.f32.mrb[0].mxu0
    %v1088 = vadd.f32 %v995, %v1087
    %v1089 = vpop.f32.mrb[0].mxu0
    %v1090 = vpop.f32.mrb[0].mxu0
    %v1091 = vadd.f32 %v995, %v1090
    %v1092 = vpop.f32.mrb[0].mxu0
    %1093 = vdwg.mxu0
    %v1094 = vlaneseq
    %v1095 = vand.u32 %v1094, 127
    %vm1096 = vcmp.lt.s32.totalorder %v1095, 8
    %v1097 = vsel %vm1096, %v1032, -1e+30
    %v1098 = vsel %vm1096, %v1035, -1e+30
    %v1099 = vsel %vm1096, %v1040, -1e+30
    %v1100 = vsel %vm1096, %v1043, -1e+30
    %v1101 = vsel %vm1096, %v1048, -1e+30
    %v1102 = vsel %vm1096, %v1051, -1e+30
    %v1103 = vsel %vm1096, %v1056, -1e+30
    %v1104 = vsel %vm1096, %v1059, -1e+30
    %v1105 = vsel %vm1096, %v1064, -1e+30
    %v1106 = vsel %vm1096, %v1067, -1e+30
    %v1107 = vsel %vm1096, %v1072, -1e+30
    %v1108 = vsel %vm1096, %v1075, -1e+30
    %v1109 = vsel %vm1096, %v1080, -1e+30
    %v1110 = vsel %vm1096, %v1083, -1e+30
    %v1111 = vsel %vm1096, %v1088, -1e+30
    %v1112 = vsel %vm1096, %v1091, -1e+30
    %1113 = vmax.xlane.f32.xlu0 %v1097
    %v1114 = vpop.xlane.xlu0 %1113
    %1115 = vmax.xlane.f32.xlu0 %v1098
    %v1116 = vpop.xlane.xlu0 %1115
    %1117 = vmax.xlane.f32.xlu0 %v1099
    %v1118 = vpop.xlane.xlu0 %1117
    %1119 = vmax.xlane.f32.xlu0 %v1100
    %v1120 = vpop.xlane.xlu0 %1119
    %1121 = vmax.xlane.f32.xlu0 %v1101
    %v1122 = vpop.xlane.xlu0 %1121
    %1123 = vmax.xlane.f32.xlu0 %v1102
    %v1124 = vpop.xlane.xlu0 %1123
    %1125 = vmax.xlane.f32.xlu0 %v1103
    %v1126 = vpop.xlane.xlu0 %1125
    %1127 = vmax.xlane.f32.xlu0 %v1104
    %v1128 = vpop.xlane.xlu0 %1127
    %1129 = vmax.xlane.f32.xlu0 %v1105
    %v1130 = vpop.xlane.xlu0 %1129
    %1131 = vmax.xlane.f32.xlu0 %v1106
    %v1132 = vpop.xlane.xlu0 %1131
    %1133 = vmax.xlane.f32.xlu0 %v1107
    %v1134 = vpop.xlane.xlu0 %1133
    %1135 = vmax.xlane.f32.xlu0 %v1108
    %v1136 = vpop.xlane.xlu0 %1135
    %1137 = vmax.xlane.f32.xlu0 %v1109
    %v1138 = vpop.xlane.xlu0 %1137
    %1139 = vmax.xlane.f32.xlu0 %v1110
    %v1140 = vpop.xlane.xlu0 %1139
    %1141 = vmax.xlane.f32.xlu0 %v1111
    %v1142 = vpop.xlane.xlu0 %1141
    %1143 = vmax.xlane.f32.xlu0 %v1112
    %v1144 = vpop.xlane.xlu0 %1143
    %v1145 = vsub.f32 %v1097, %v1114
    %v1146 = vsub.f32 %v1098, %v1116
    %v1147 = vsub.f32 %v1099, %v1118
    %v1148 = vsub.f32 %v1100, %v1120
    %v1149 = vsub.f32 %v1101, %v1122
    %v1150 = vsub.f32 %v1102, %v1124
    %v1151 = vsub.f32 %v1103, %v1126
    %v1152 = vsub.f32 %v1104, %v1128
    %v1153 = vsub.f32 %v1105, %v1130
    %v1154 = vsub.f32 %v1106, %v1132
    %v1155 = vsub.f32 %v1107, %v1134
    %v1156 = vsub.f32 %v1108, %v1136
    %v1157 = vsub.f32 %v1109, %v1138
    %v1158 = vsub.f32 %v1110, %v1140
    %v1159 = vsub.f32 %v1111, %v1142
    %v1160 = vsub.f32 %v1112, %v1144
    %v1161 = vmul.f32 %v1145, 1.442695
    %v1162 = vpow.pop %v1161
    %v1163 = vmul.f32 %v1146, 1.442695
    %v1164 = vpow.pop %v1163
    %v1165 = vmul.f32 %v1147, 1.442695
    %v1166 = vpow.pop %v1165
    %v1167 = vmul.f32 %v1148, 1.442695
    %v1168 = vpow.pop %v1167
    %v1169 = vmul.f32 %v1149, 1.442695
    %v1170 = vpow.pop %v1169
    %v1171 = vmul.f32 %v1150, 1.442695
    %v1172 = vpow.pop %v1171
    %v1173 = vmul.f32 %v1151, 1.442695
    %v1174 = vpow.pop %v1173
    %v1175 = vmul.f32 %v1152, 1.442695
    %v1176 = vpow.pop %v1175
    %v1177 = vmul.f32 %v1153, 1.442695
    %v1178 = vpow.pop %v1177
    %v1179 = vmul.f32 %v1154, 1.442695
    %v1180 = vpow.pop %v1179
    %v1181 = vmul.f32 %v1155, 1.442695
    %v1182 = vpow.pop %v1181
    %v1183 = vmul.f32 %v1156, 1.442695
    %v1184 = vpow.pop %v1183
    %v1185 = vmul.f32 %v1157, 1.442695
    %v1186 = vpow.pop %v1185
    %v1187 = vmul.f32 %v1158, 1.442695
    %v1188 = vpow.pop %v1187
    %v1189 = vmul.f32 %v1159, 1.442695
    %v1190 = vpow.pop %v1189
    %v1191 = vmul.f32 %v1160, 1.442695
    %v1192 = vpow.pop %v1191
    %1193 = vadd.xlane.f32.xlu0 %v1162
    %v1194 = vpop.xlane.xlu0 %1193
    %1195 = vadd.xlane.f32.xlu0 %v1164
    %v1196 = vpop.xlane.xlu0 %1195
    %1197 = vadd.xlane.f32.xlu0 %v1166
    %v1198 = vpop.xlane.xlu0 %1197
    %1199 = vadd.xlane.f32.xlu0 %v1168
    %v1200 = vpop.xlane.xlu0 %1199
    %1201 = vadd.xlane.f32.xlu0 %v1170
    %v1202 = vpop.xlane.xlu0 %1201
    %1203 = vadd.xlane.f32.xlu0 %v1172
    %v1204 = vpop.xlane.xlu0 %1203
    %1205 = vadd.xlane.f32.xlu0 %v1174
    %v1206 = vpop.xlane.xlu0 %1205
    %1207 = vadd.xlane.f32.xlu0 %v1176
    %v1208 = vpop.xlane.xlu0 %1207
    %1209 = vadd.xlane.f32.xlu0 %v1178
    %v1210 = vpop.xlane.xlu0 %1209
    %1211 = vadd.xlane.f32.xlu0 %v1180
    %v1212 = vpop.xlane.xlu0 %1211
    %1213 = vadd.xlane.f32.xlu0 %v1182
    %v1214 = vpop.xlane.xlu0 %1213
    %1215 = vadd.xlane.f32.xlu0 %v1184
    %v1216 = vpop.xlane.xlu0 %1215
    %1217 = vadd.xlane.f32.xlu0 %v1186
    %v1218 = vpop.xlane.xlu0 %1217
    %1219 = vadd.xlane.f32.xlu0 %v1188
    %v1220 = vpop.xlane.xlu0 %1219
    %1221 = vadd.xlane.f32.xlu0 %v1190
    %v1222 = vpop.xlane.xlu0 %1221
    %1223 = vadd.xlane.f32.xlu0 %v1192
    %v1224 = vpop.xlane.xlu0 %1223
    %v1225 = vlog2.pop %v1194
    %v1226 = vmul.f32 %v1225, 0.6931472
    %v1227 = vlog2.pop %v1196
    %v1228 = vmul.f32 %v1227, 0.6931472
    %v1229 = vlog2.pop %v1198
    %v1230 = vmul.f32 %v1229, 0.6931472
    %v1231 = vlog2.pop %v1200
    %v1232 = vmul.f32 %v1231, 0.6931472
    %v1233 = vlog2.pop %v1202
    %v1234 = vmul.f32 %v1233, 0.6931472
    %v1235 = vlog2.pop %v1204
    %v1236 = vmul.f32 %v1235, 0.6931472
    %v1237 = vlog2.pop %v1206
    %v1238 = vmul.f32 %v1237, 0.6931472
    %v1239 = vlog2.pop %v1208
    %v1240 = vmul.f32 %v1239, 0.6931472
    %v1241 = vlog2.pop %v1210
    %v1242 = vmul.f32 %v1241, 0.6931472
    %v1243 = vlog2.pop %v1212
    %v1244 = vmul.f32 %v1243, 0.6931472
    %v1245 = vlog2.pop %v1214
    %v1246 = vmul.f32 %v1245, 0.6931472
    %v1247 = vlog2.pop %v1216
    %v1248 = vmul.f32 %v1247, 0.6931472
    %v1249 = vlog2.pop %v1218
    %v1250 = vmul.f32 %v1249, 0.6931472
    %v1251 = vlog2.pop %v1220
    %v1252 = vmul.f32 %v1251, 0.6931472
    %v1253 = vlog2.pop %v1222
    %v1254 = vmul.f32 %v1253, 0.6931472
    %v1255 = vlog2.pop %v1224
    %v1256 = vmul.f32 %v1255, 0.6931472
    %v1257 = vsub.f32 %v1145, %v1226
    %v1258 = vsub.f32 %v1146, %v1228
    %v1259 = vsub.f32 %v1147, %v1230
    %v1260 = vsub.f32 %v1148, %v1232
    %v1261 = vsub.f32 %v1149, %v1234
    %v1262 = vsub.f32 %v1150, %v1236
    %v1263 = vsub.f32 %v1151, %v1238
    %v1264 = vsub.f32 %v1152, %v1240
    %v1265 = vsub.f32 %v1153, %v1242
    %v1266 = vsub.f32 %v1154, %v1244
    %v1267 = vsub.f32 %v1155, %v1246
    %v1268 = vsub.f32 %v1156, %v1248
    %v1269 = vsub.f32 %v1157, %v1250
    %v1270 = vsub.f32 %v1158, %v1252
    %v1271 = vsub.f32 %v1159, %v1254
    %v1272 = vsub.f32 %v1160, %v1256
    %v1273 = vsel %vm1096, %v1257, 0.0
    %v1274 = vsel %vm1096, %v1258, 0.0
    %v1275 = vsel %vm1096, %v1259, 0.0
    %v1276 = vsel %vm1096, %v1260, 0.0
    %v1277 = vsel %vm1096, %v1261, 0.0
    %v1278 = vsel %vm1096, %v1262, 0.0
    %v1279 = vsel %vm1096, %v1263, 0.0
    %v1280 = vsel %vm1096, %v1264, 0.0
    %v1281 = vsel %vm1096, %v1265, 0.0
    %v1282 = vsel %vm1096, %v1266, 0.0
    %v1283 = vsel %vm1096, %v1267, 0.0
    %v1284 = vsel %vm1096, %v1268, 0.0
    %v1285 = vsel %vm1096, %v1269, 0.0
    %v1286 = vsel %vm1096, %v1270, 0.0
    %v1287 = vsel %vm1096, %v1271, 0.0
    %v1288 = vsel %vm1096, %v1272, 0.0
    %1289 = vst [vmem:[#allocation11] sm:$0xff] %v1273
    %1290 = vst [vmem:[#allocation11 + $0x8] sm:$0xff] %v1274
    %1291 = vst [vmem:[#allocation11 + $0x10] sm:$0xff] %v1275
    %1292 = vst [vmem:[#allocation11 + $0x18] sm:$0xff] %v1276
    %1293 = vst [vmem:[#allocation11 + $0x20] sm:$0xff] %v1277
    %1294 = vst [vmem:[#allocation11 + $0x28] sm:$0xff] %v1278
    %1295 = vst [vmem:[#allocation11 + $0x30] sm:$0xff] %v1279
    %1296 = vst [vmem:[#allocation11 + $0x38] sm:$0xff] %v1280
    %1297 = vst [vmem:[#allocation11 + $0x40] sm:$0xff] %v1281
    %1298 = vst [vmem:[#allocation11 + $0x48] sm:$0xff] %v1282
    %1299 = vst [vmem:[#allocation11 + $0x50] sm:$0xff] %v1283
    %1300 = vst [vmem:[#allocation11 + $0x58] sm:$0xff] %v1284
    %1301 = vst [vmem:[#allocation11 + $0x60] sm:$0xff] %v1285
    %1302 = vst [vmem:[#allocation11 + $0x68] sm:$0xff] %v1286
    %1303 = vst [vmem:[#allocation11 + $0x70] sm:$0xff] %v1287
    %1304 = vst [vmem:[#allocation11 + $0x78] sm:$0xff] %v1288
    // Predicated region
    $region54: #{tpu_custom_call.1} parent=1 // pred_check
      _
    $region55: #{tpu_custom_call.1} parent=1 // pred_check_branch
      %1306 = sbr.rel (0) target = $region57
    $region56: #{tpu_custom_call.1} parent=1 // pred_region
      %s1308 = ssub.s32 2048, 2048
      %1309 = vsyncadd [#allocation4], %s1308
      %s1310 = sshll.u32 [#allocation11], 4
      %s1311 = int_to_ptr.vmem [resolvable:$true] %s1310
      %1316 = dma.vmem_to_hbm [thread:$0]  %s1311, 2048, %s8, [#allocation4], 128, 128, 8
    $region57: #{tpu_custom_call.1} parent=1 // pred_fallthru
      _
    // Predicated region
    $region58: #{tpu_custom_call.1} parent=1 // pred_check
      _
    $region59: #{tpu_custom_call.1} parent=1 // pred_check_branch
      %1318 = sbr.rel (0) target = $region61
    $region60: #{tpu_custom_call.1} parent=1 // pred_region
      %1319 = dma.done [#allocation4], 2048
    $region61: #{tpu_custom_call.1} parent=1 // pred_fallthru
      _
    %1320 = vsyncpa [#allocation3], 1
    %1321 = vsyncpa [#allocation6], 1
    %1322 = vsyncpa [#allocation9], 1
    %1323 = vsyncpa [#allocation4], 1

</llo_original>
